<compile_context>
chip_gen: v7x
topology: tpu7x:2x2x1
jax: 0.10.0
libtpu: 0.0.40
codegen_flags: <defaults>
</compile_context>

<pallas_src>
import functools

import jax
import jax.numpy as jnp
from jax import lax
from jax.experimental import pallas as pl
from jax.experimental.pallas import tpu as pltpu


def _silu(y):
    return y * jax.nn.sigmoid(y)


# ----------------------------------------------------------------------------
# Fused kernel: one grid step == one (image, row-pair tile).
# x_ref layout: [TH2, 2*Wq, 2*Cin]; sublane = hi*Wq + wq, lane = wi*Cin + c.
#   Row-pair p holds image rows (2p, 2p+1) selected by hi; W-pair wq=0 is the
#   3x3 conv's zero left padding, wq in [1, W2] are real column pairs, wq>W2
#   is layout padding (never read). halo_ref is the row pair just above the
#   tile (used only for the 3x3 conv's kh=0 taps; zeroed on the first tile).
# ----------------------------------------------------------------------------
def mp_fused_kernel(x_ref, halo_ref, w1_ref, b1_ref, w2_ref, b2_ref,
                    w3_ref, b3_ref, mask_ref, o_ref, x1s_ref,
                    *, TH2, W2, Wq, Cin, c1, c2, c3):
    f32 = jnp.float32
    S = 2 * Wq                        # sublanes per row pair
    t = pl.program_id(1)

    # Weights stay in their storage dtype (bf16 goes straight to the MXU at
    # full rate); biases / mask / accumulation / epilogue are f32 (v5e-safe).
    W1 = w1_ref[...]                  # [Cin, c1]
    W2m = w2_ref[...]                 # block-diag [2*Cin, 2*c2]
    W3 = w3_ref[...]                  # [9*c2, c3], (kh, kw, cin) major
    B1 = b1_ref[...]
    B2 = b2_ref[...]
    B3 = b3_ref[...]
    MSK = mask_ref[...]               # [S, 2*c2] f32, zeroes pad W-pairs

    xb = x_ref[...]                   # [TH2, S, 2*Cin]; loaded once, used twice

    # ---- branch 1 stage 1: cbs2 (1x1 conv + BN + SiLU) as ONE matmul --------
    y2 = jnp.dot(xb.reshape(TH2 * S, 2 * Cin), W2m,
                 preferred_element_type=f32) + B2
    y2 = _silu(y2).reshape(TH2, S, 2 * c2) * MSK.reshape(1, S, 2 * c2)
    x1s_ref[1:TH2 + 1] = y2

    # Halo row pair (cbs2 of the row pair above this tile), or zero top pad.
    @pl.when(t == 0)
    def _():
        x1s_ref[0] = jnp.zeros((S, 2 * c2), f32)

    @pl.when(t > 0)
    def _():
        hv = jnp.dot(halo_ref[...], W2m, preferred_element_type=f32) + B2
        x1s_ref[0] = _silu(hv) * MSK

    # ---- branch 0: 2x2 max pool + cbs1 as ONE matmul ------------------------
    p00 = xb[:, 1:W2 + 1, 0:Cin]
    p01 = xb[:, 1:W2 + 1, Cin:2 * Cin]
    p10 = xb[:, Wq + 1:Wq + 1 + W2, 0:Cin]
    p11 = xb[:, Wq + 1:Wq + 1 + W2, Cin:2 * Cin]
    pooled = jnp.maximum(jnp.maximum(p00, p01), jnp.maximum(p10, p11))
    y0 = jnp.dot(pooled.reshape(TH2 * W2, Cin), W1,
                 preferred_element_type=f32) + B1
    y0 = _silu(y0)                                   # [TH2*W2, c1] f32

    # ---- branch 1 stage 2: 3x3 s2 p1 conv as lane-concat im2col + ONE matmul
    taps = []
    for kh in range(3):
        row_lo = 0 if kh == 0 else 1                 # which x1s row pair
        hbase = 0 if kh == 1 else Wq                 # hi within the pair
        for kw in range(3):
            sb = hbase + (0 if kw == 0 else 1)       # wq slice start
            lb = 0 if kw == 1 else c2                # wi lane offset
            tap = x1s_ref[row_lo:row_lo + TH2, sb:sb + W2, lb:lb + c2]
            taps.append(tap.reshape(TH2 * W2, c2))
    patches = jnp.concatenate(taps, axis=-1)         # [TH2*W2, 9*c2]
    y1 = jnp.dot(patches.astype(W3.dtype), W3,
                 preferred_element_type=f32) + B3
    y1 = _silu(y1)                                   # [TH2*W2, c3] f32

    # ---- fused concat + single lane-dense store ------------------------------
    o_ref[...] = jnp.concatenate([y0, y1], axis=-1).reshape(
        TH2, W2, c1 + c3).astype(o_ref.dtype)


# ----------------------------------------------------------------------------
# BN folding + parameter construction (deterministic)
# ----------------------------------------------------------------------------
def fold_bn(w_lastaxis_out, gamma, beta, mean, var, eps=1e-3):
    scale = gamma / jnp.sqrt(var + eps)
    return w_lastaxis_out * scale, (beta - mean * scale)


def make_cbs_params(key, cin, cout, ksize):
    kw, kg, kb, km, kv = jax.random.split(key, 5)
    w = jax.random.normal(kw, (cout, cin, ksize, ksize), jnp.float32) * 0.1
    gamma = 1.0 + 0.1 * jax.random.normal(kg, (cout,), jnp.float32)
    beta = 0.1 * jax.random.normal(kb, (cout,), jnp.float32)
    mean = 0.1 * jax.random.normal(km, (cout,), jnp.float32)
    var = 1.0 + 0.1 * jnp.abs(jax.random.normal(kv, (cout,), jnp.float32))
    return dict(w=w, gamma=gamma, beta=beta, mean=mean, var=var)


# ----------------------------------------------------------------------------
# Full mp forward (Pallas)
# ----------------------------------------------------------------------------
def mp_forward(x_nchw, p1, p2, p3, compute_dtype=jnp.float32, row_tile=None):
    N, Cin, H, W = x_nchw.shape
    assert H % 2 == 0 and W % 2 == 0, "mp requires even H, W"
    H2, W2 = H // 2, W // 2

    # Row-pair tile size along H2 (grid axis 1); must divide H2.
    TH2 = H2 if row_tile is None else max(1, min(int(row_tile), H2))
    while H2 % TH2:
        TH2 -= 1
    n_tiles = H2 // TH2

    # Pad the W-pair axis so 2*Wq is a multiple of 16 (clean sublane layout
    # for the in-kernel merge/split reshapes in both f32 and bf16 storage).
    Wq = ((W2 + 1 + 7) // 8) * 8

    # ---- fold eval-mode BN into the conv weights / biases --------------------
    w1 = jnp.transpose(p1["w"][:, :, 0, 0], (1, 0))                  # [Cin, c1]
    w1, b1 = fold_bn(w1, p1["gamma"], p1["beta"], p1["mean"], p1["var"])
    c1 = w1.shape[1]

    w2 = jnp.transpose(p2["w"][:, :, 0, 0], (1, 0))                  # [Cin, c2]
    w2, b2 = fold_bn(w2, p2["gamma"], p2["beta"], p2["mean"], p2["var"])
    c2 = w2.shape[1]

    w3 = jnp.transpose(p3["w"], (2, 3, 1, 0)).reshape(9 * c2, -1)    # [9*c2, c3]
    w3, b3 = fold_bn(w3, p3["gamma"], p3["beta"], p3["mean"], p3["var"])
    c3 = w3.shape[1]

    # Block-diagonal 1x1 weights so cbs2 handles both columns of a W-pair
    # (packed on the lane dim) in a single 2-D matmul.
    w2bd = jnp.zeros((2 * Cin, 2 * c2), w2.dtype)
    w2bd = w2bd.at[:Cin, :c2].set(w2).at[Cin:, c2:].set(w2)
    b2t = jnp.concatenate([b2, b2]).reshape(1, 2 * c2)

    # ---- single wrapper layout pass: NCHW -> [N, H2, (hi,Wq), (wi,Cin)] ------
    # wq=0 is the 3x3 conv's zero left padding; wq>W2 is layout padding (never
    # read); the top pad row pair is synthesized in-kernel; bottom/right pads
    # are never read by a 3x3/stride-2/pad-1 conv on even H, W.
    x = jnp.transpose(x_nchw, (0, 2, 3, 1))                          # NHWC
    x6 = x.reshape(N, H2, 2, W2, 2, Cin)
    x6 = jnp.pad(x6, ((0, 0), (0, 0), (0, 0), (1, Wq - (W2 + 1)), (0, 0), (0, 0)))
    xq = x6.reshape(N, H2, 2 * Wq, 2 * Cin).astype(compute_dtype)

    # Mask that zeroes cbs2's output on pad W-pairs (SiLU(bias) != 0 there).
    wq_idx = jnp.arange(Wq)
    valid = ((wq_idx >= 1) & (wq_idx <= W2)).astype(jnp.float32)     # [Wq]
    mask = jnp.tile(valid, 2)[:, None] * jnp.ones((1, 2 * c2), jnp.float32)

    cat = c1 + c3
    kernel = functools.partial(mp_fused_kernel, TH2=TH2, W2=W2, Wq=Wq,
                               Cin=Cin, c1=c1, c2=c2, c3=c3)
    const2 = lambda n, t: (0, 0)

    out = pl.pallas_call(
        kernel,
        out_shape=jax.ShapeDtypeStruct((N, H2, W2, cat), jnp.float32),
        grid_spec=pltpu.PrefetchScalarGridSpec(
            num_scalar_prefetch=0,
            grid=(N, n_tiles),                 # batch x row-pair tiles
            in_specs=[
                # main tile: TH2 row pairs of one image
                pl.BlockSpec((None, TH2, 2 * Wq, 2 * Cin),
                             lambda n, t: (n, t, 0, 0)),
                # halo: the row pair just above the tile (clamped; zeroed in-kernel
                # for the first tile, where it provides the conv's top padding)
                pl.BlockSpec((None, None, 2 * Wq, 2 * Cin),
                             lambda n, t: (n, jnp.maximum(t * TH2 - 1, 0), 0, 0)),
                # TODO(synk): pipeline_mode=pl.Buffered(1) on the constant-index
                # weight/bias/mask specs would save a little VMEM on v7x.
                pl.BlockSpec((Cin, c1), const2),
                pl.BlockSpec((1, c1), const2),
                pl.BlockSpec((2 * Cin, 2 * c2), const2),
                pl.BlockSpec((1, 2 * c2), const2),
                pl.BlockSpec((9 * c2, c3), const2),
                pl.BlockSpec((1, c3), const2),
                pl.BlockSpec((2 * Wq, 2 * c2), const2),
            ],
            out_specs=pl.BlockSpec((None, TH2, W2, cat),
                                   lambda n, t: (n, t, 0, 0)),
            scratch_shapes=[pltpu.VMEM((TH2 + 1, 2 * Wq, 2 * c2), jnp.float32)],
        ),
        compiler_params=pltpu.CompilerParams(
            dimension_semantics=("parallel", "parallel"),
            vmem_limit_bytes=48 * 1024 * 1024),
    )(xq, xq,
      w1.astype(compute_dtype), b1.reshape(1, c1),
      w2bd.astype(compute_dtype), b2t,
      w3.astype(compute_dtype), b3.reshape(1, c3),
      mask)

    # TODO(synk): return NHWC directly if the consumer allows; this transpose
    # only exists to match the PyTorch NCHW boundary.
    return jnp.transpose(out, (0, 3, 1, 2))


# ----------------------------------------------------------------------------
# Pure-JAX reference (verification only)
# ----------------------------------------------------------------------------
def mp_reference(x_nchw, p1, p2, p3):
    x = jnp.transpose(x_nchw, (0, 2, 3, 1))
    dn = ("NHWC", "HWIO", "NHWC")

    def cbs(inp, p, stride, pad):
        w = jnp.transpose(p["w"], (2, 3, 1, 0))  # HWIO
        y = lax.conv_general_dilated(inp, w, (stride, stride),
                                     [(pad, pad), (pad, pad)],
                                     dimension_numbers=dn)
        scale = p["gamma"] / jnp.sqrt(p["var"] + 1e-3)
        y = (y - p["mean"]) * scale + p["beta"]
        return y * jax.nn.sigmoid(y)

    x0 = lax.reduce_window(x, -jnp.inf, lax.max, (1, 2, 2, 1), (1, 2, 2, 1), "VALID")
    x0 = cbs(x0, p1, 1, 0)
    x1 = cbs(x, p2, 1, 0)
    x1 = cbs(x1, p3, 2, 1)
    return jnp.transpose(jnp.concatenate([x0, x1], axis=-1), (0, 3, 1, 2))


# ----------------------------------------------------------------------------
if __name__ == "__main__":
    key = jax.random.PRNGKey(0)
    kx, k1, k2, k3 = jax.random.split(key, 4)

    N, Cin, H, W = 2, 4, 16, 16
    out_ = 8                       # mp(in_=4, out_=8) -> each cbs produces out_//2 = 4
    chalf = out_ // 2

    x = jax.random.normal(kx, (N, Cin, H, W), jnp.float32)
    p1 = make_cbs_params(k1, Cin, chalf, 1)      # cbs1: 1x1 s1
    p2 = make_cbs_params(k2, Cin, chalf, 1)      # cbs2: 1x1 s1
    p3 = make_cbs_params(k3, chalf, chalf, 3)    # cbs3: 3x3 s2 pad1

    ref = mp_reference(x, p1, p2, p3)

    # f32, row-tiled (2 row tiles -> exercises the halo path)
    fwd_f32_t = jax.jit(functools.partial(mp_forward,
                                          compute_dtype=jnp.float32, row_tile=4))
    out = jax.block_until_ready(fwd_f32_t(x, p1, p2, p3))
    assert out.shape == (N, out_, H // 2, W // 2), out.shape
    err = float(jnp.max(jnp.abs(out - ref)))
    assert jnp.allclose(out, ref, atol=2e-4, rtol=2e-4), err

    # f32, whole-image blocks (single row tile per image)
    fwd_f32_w = jax.jit(functools.partial(mp_forward,
                                          compute_dtype=jnp.float32, row_tile=None))
    outw = jax.block_until_ready(fwd_f32_w(x, p1, p2, p3))
    errw = float(jnp.max(jnp.abs(outw - ref)))
    assert jnp.allclose(outw, ref, atol=2e-4, rtol=2e-4), errw

    # bf16 storage + bf16 MXU operands (f32 accumulate/epilogue) — loose check
    fwd_bf16 = jax.jit(functools.partial(mp_forward,
                                         compute_dtype=jnp.bfloat16, row_tile=4))
    out_bf = jax.block_until_ready(fwd_bf16(x, p1, p2, p3))
    err_bf = float(jnp.max(jnp.abs(out_bf - ref)))
    assert jnp.allclose(out_bf, ref, atol=5e-2, rtol=5e-2), err_bf

    print("KERNEL_OK")
</pallas_src>

<mosaic_0001>
module attributes {stable_mosaic.version = 11 : i64} {
  func.func @mp_fused_kernel(%arg0: i32, %arg1: i32, %arg2: memref<1x4x32x8xf32, #tpu.memory_space<vmem>>, %arg3: memref<1x1x32x8xf32, #tpu.memory_space<vmem>>, %arg4: memref<4x4xf32, #tpu.memory_space<vmem>>, %arg5: memref<1x4xf32, #tpu.memory_space<vmem>>, %arg6: memref<8x8xf32, #tpu.memory_space<vmem>>, %arg7: memref<1x8xf32, #tpu.memory_space<vmem>>, %arg8: memref<36x4xf32, #tpu.memory_space<vmem>>, %arg9: memref<1x4xf32, #tpu.memory_space<vmem>>, %arg10: memref<32x8xf32, #tpu.memory_space<vmem>>, %arg11: memref<1x4x8x8xf32, #tpu.memory_space<vmem>>, %arg12: memref<5x32x8xf32, #tpu.memory_space<vmem>>) attributes {dimension_semantics = [#tpu.dimension_semantics<parallel>, #tpu.dimension_semantics<parallel>], iteration_bounds = array<i64: 2, 2>, scalar_prefetch = 0 : i64, scratch_operands = 1 : i64, tpu.core_type = #tpu.core_type<tc>, window_params = [{transform_indices = @transform_0, window_bounds = array<i64: 1, 4, 32, 8>}, {transform_indices = @transform_1, window_bounds = array<i64: 1, 1, 32, 8>}, {pipeline_mode = #tpu.pipeline_mode<synchronous>, transform_indices = @transform_2, window_bounds = array<i64: 4, 4>}, {pipeline_mode = #tpu.pipeline_mode<synchronous>, transform_indices = @transform_3, window_bounds = array<i64: 1, 4>}, {pipeline_mode = #tpu.pipeline_mode<synchronous>, transform_indices = @transform_4, window_bounds = array<i64: 8, 8>}, {pipeline_mode = #tpu.pipeline_mode<synchronous>, transform_indices = @transform_5, window_bounds = array<i64: 1, 8>}, {pipeline_mode = #tpu.pipeline_mode<synchronous>, transform_indices = @transform_6, window_bounds = array<i64: 36, 4>}, {pipeline_mode = #tpu.pipeline_mode<synchronous>, transform_indices = @transform_7, window_bounds = array<i64: 1, 4>}, {pipeline_mode = #tpu.pipeline_mode<synchronous>, transform_indices = @transform_8, window_bounds = array<i64: 32, 8>}, {transform_indices = @transform_9, window_bounds = array<i64: 1, 4, 8, 8>}]} {
    %c0 = arith.constant 0 : index
    %c0_0 = arith.constant 0 : index
    %0 = vector.load %arg4[%c0, %c0_0] : memref<4x4xf32, #tpu.memory_space<vmem>>, vector<4x4xf32>
    %c0_1 = arith.constant 0 : index
    %c0_2 = arith.constant 0 : index
    %1 = vector.load %arg6[%c0_1, %c0_2] : memref<8x8xf32, #tpu.memory_space<vmem>>, vector<8x8xf32>
    %c0_3 = arith.constant 0 : index
    %c0_4 = arith.constant 0 : index
    %2 = vector.load %arg8[%c0_3, %c0_4] : memref<36x4xf32, #tpu.memory_space<vmem>>, vector<36x4xf32>
    %c0_5 = arith.constant 0 : index
    %c0_6 = arith.constant 0 : index
    %3 = vector.load %arg5[%c0_5, %c0_6] : memref<1x4xf32, #tpu.memory_space<vmem>>, vector<1x4xf32>
    %c0_7 = arith.constant 0 : index
    %c0_8 = arith.constant 0 : index
    %4 = vector.load %arg7[%c0_7, %c0_8] : memref<1x8xf32, #tpu.memory_space<vmem>>, vector<1x8xf32>
    %c0_9 = arith.constant 0 : index
    %c0_10 = arith.constant 0 : index
    %5 = vector.load %arg9[%c0_9, %c0_10] : memref<1x4xf32, #tpu.memory_space<vmem>>, vector<1x4xf32>
    %c0_11 = arith.constant 0 : index
    %c0_12 = arith.constant 0 : index
    %6 = vector.load %arg10[%c0_11, %c0_12] : memref<32x8xf32, #tpu.memory_space<vmem>>, vector<32x8xf32>
    %c0_13 = arith.constant 0 : index
    %c0_14 = arith.constant 0 : index
    %c0_15 = arith.constant 0 : index
    %c0_16 = arith.constant 0 : index
    %7 = vector.load %arg2[%c0_13, %c0_14, %c0_15, %c0_16] : memref<1x4x32x8xf32, #tpu.memory_space<vmem>>, vector<1x4x32x8xf32>
    %8 = vector.shape_cast %7 : vector<1x4x32x8xf32> to vector<4x32x8xf32>
    %9 = vector.shape_cast %8 : vector<4x32x8xf32> to vector<128x8xf32>
    %cst = arith.constant dense<0.000000e+00> : vector<128x8xf32>
    %10 = tpu.matmul %9, %1, %cst {dimension_numbers = #tpu.dot_dimension_numbers<[1], [0], [0], [1], [0, 0, 1, 1], [], []>} : vector<128x8xf32>, vector<8x8xf32>, vector<128x8xf32> -> vector<128x8xf32>
    %11 = vector.broadcast %4 : vector<1x8xf32> to vector<128x8xf32>
    %12 = arith.addf %10, %11 : vector<128x8xf32>
    %13 = arith.negf %12 : vector<128x8xf32>
    %14 = math.exp %13 : vector<128x8xf32>
    %cst_17 = arith.constant 1.000000e+00 : f32
    %15 = vector.broadcast %cst_17 : f32 to vector<128x8xf32>
    %16 = arith.addf %15, %14 : vector<128x8xf32>
    %17 = arith.divf %15, %16 : vector<128x8xf32>
    %18 = arith.mulf %12, %17 : vector<128x8xf32>
    %19 = vector.shape_cast %18 : vector<128x8xf32> to vector<4x32x8xf32>
    %20 = vector.shape_cast %6 : vector<32x8xf32> to vector<1x32x8xf32>
    %21 = vector.broadcast %20 : vector<1x32x8xf32> to vector<4x32x8xf32>
    %22 = arith.mulf %19, %21 : vector<4x32x8xf32>
    %c1 = arith.constant 1 : index
    %c0_18 = arith.constant 0 : index
    %c0_19 = arith.constant 0 : index
    %23 = vector.load %arg12[%c1, %c0_18, %c0_19] : memref<5x32x8xf32, #tpu.memory_space<vmem>>, vector<4x32x8xf32>
    tpu.vector_store %arg12[%c1, %c0_18, %c0_19], %22 {strides = array<i32>} : memref<5x32x8xf32, #tpu.memory_space<vmem>>, vector<4x32x8xf32>,
    %c0_i32 = arith.constant 0 : i32
    %24 = arith.cmpi eq, %arg1, %c0_i32 : i32
    %25 = arith.extui %24 : i1 to i32
    %c0_i32_20 = arith.constant 0 : i32
    %26 = arith.cmpi ne, %25, %c0_i32_20 : i32
    scf.if %26 {
      %cst_55 = arith.constant 0.000000e+00 : f32
      %80 = vector.broadcast %cst_55 : f32 to vector<32x8xf32>
      %c0_56 = arith.constant 0 : index
      %c0_57 = arith.constant 0 : index
      %c0_58 = arith.constant 0 : index
      %81 = vector.load %arg12[%c0_56, %c0_57, %c0_58] : memref<5x32x8xf32, #tpu.memory_space<vmem>>, vector<1x32x8xf32>
      %82 = vector.shape_cast %81 : vector<1x32x8xf32> to vector<32x8xf32>
      %83 = vector.shape_cast %80 : vector<32x8xf32> to vector<1x32x8xf32>
      tpu.vector_store %arg12[%c0_56, %c0_57, %c0_58], %83 {strides = array<i32>} : memref<5x32x8xf32, #tpu.memory_space<vmem>>, vector<1x32x8xf32>,
    } else {
    }
    %c0_i32_21 = arith.constant 0 : i32
    %27 = arith.cmpi sgt, %arg1, %c0_i32_21 : i32
    %28 = arith.extui %27 : i1 to i32
    %c0_i32_22 = arith.constant 0 : i32
    %29 = arith.cmpi ne, %28, %c0_i32_22 : i32
    scf.if %29 {
      %c0_55 = arith.constant 0 : index
      %c0_56 = arith.constant 0 : index
      %c0_57 = arith.constant 0 : index
      %c0_58 = arith.constant 0 : index
      %80 = vector.load %arg3[%c0_55, %c0_56, %c0_57, %c0_58] : memref<1x1x32x8xf32, #tpu.memory_space<vmem>>, vector<1x1x32x8xf32>
      %81 = vector.shape_cast %80 : vector<1x1x32x8xf32> to vector<32x8xf32>
      %cst_59 = arith.constant dense<0.000000e+00> : vector<32x8xf32>
      %82 = tpu.matmul %81, %1, %cst_59 {dimension_numbers = #tpu.dot_dimension_numbers<[1], [0], [0], [1], [0, 0, 1, 1], [], []>} : vector<32x8xf32>, vector<8x8xf32>, vector<32x8xf32> -> vector<32x8xf32>
      %83 = vector.broadcast %4 : vector<1x8xf32> to vector<32x8xf32>
      %84 = arith.addf %82, %83 : vector<32x8xf32>
      %85 = arith.negf %84 : vector<32x8xf32>
      %86 = math.exp %85 : vector<32x8xf32>
      %cst_60 = arith.constant 1.000000e+00 : f32
      %87 = vector.broadcast %cst_60 : f32 to vector<32x8xf32>
      %88 = arith.addf %87, %86 : vector<32x8xf32>
      %89 = arith.divf %87, %88 : vector<32x8xf32>
      %90 = arith.mulf %84, %89 : vector<32x8xf32>
      %91 = arith.mulf %90, %6 : vector<32x8xf32>
      %c0_61 = arith.constant 0 : index
      %c0_62 = arith.constant 0 : index
      %c0_63 = arith.constant 0 : index
      %92 = vector.load %arg12[%c0_61, %c0_62, %c0_63] : memref<5x32x8xf32, #tpu.memory_space<vmem>>, vector<1x32x8xf32>
      %93 = vector.shape_cast %92 : vector<1x32x8xf32> to vector<32x8xf32>
      %94 = vector.shape_cast %91 : vector<32x8xf32> to vector<1x32x8xf32>
      tpu.vector_store %arg12[%c0_61, %c0_62, %c0_63], %94 {strides = array<i32>} : memref<5x32x8xf32, #tpu.memory_space<vmem>>, vector<1x32x8xf32>,
    } else {
    }
    %30 = vector.extract_strided_slice %8 {offsets = [0, 1, 0], sizes = [4, 8, 4], strides = [1, 1, 1]} : vector<4x32x8xf32> to vector<4x8x4xf32>
    %31 = vector.extract_strided_slice %8 {offsets = [0, 1, 4], sizes = [4, 8, 4], strides = [1, 1, 1]} : vector<4x32x8xf32> to vector<4x8x4xf32>
    %32 = vector.extract_strided_slice %8 {offsets = [0, 17, 0], sizes = [4, 8, 4], strides = [1, 1, 1]} : vector<4x32x8xf32> to vector<4x8x4xf32>
    %33 = vector.extract_strided_slice %8 {offsets = [0, 17, 4], sizes = [4, 8, 4], strides = [1, 1, 1]} : vector<4x32x8xf32> to vector<4x8x4xf32>
    %34 = arith.maximumf %30, %31 : vector<4x8x4xf32>
    %35 = arith.maximumf %32, %33 : vector<4x8x4xf32>
    %36 = arith.maximumf %34, %35 : vector<4x8x4xf32>
    %37 = vector.shape_cast %36 : vector<4x8x4xf32> to vector<32x4xf32>
    %cst_23 = arith.constant dense<0.000000e+00> : vector<32x4xf32>
    %38 = tpu.matmul %37, %0, %cst_23 {dimension_numbers = #tpu.dot_dimension_numbers<[1], [0], [0], [1], [0, 0, 1, 1], [], []>} : vector<32x4xf32>, vector<4x4xf32>, vector<32x4xf32> -> vector<32x4xf32>
    %39 = vector.broadcast %3 : vector<1x4xf32> to vector<32x4xf32>
    %40 = arith.addf %38, %39 : vector<32x4xf32>
    %41 = arith.negf %40 : vector<32x4xf32>
    %42 = math.exp %41 : vector<32x4xf32>
    %cst_24 = arith.constant 1.000000e+00 : f32
    %43 = vector.broadcast %cst_24 : f32 to vector<32x4xf32>
    %44 = arith.addf %43, %42 : vector<32x4xf32>
    %45 = arith.divf %43, %44 : vector<32x4xf32>
    %46 = arith.mulf %40, %45 : vector<32x4xf32>
    %c0_25 = arith.constant 0 : index
    %c16 = arith.constant 16 : index
    %c4 = arith.constant 4 : index
    %47 = vector.load %arg12[%c0_25, %c16, %c4] : memref<5x32x8xf32, #tpu.memory_space<vmem>>, vector<4x8x4xf32>
    %48 = vector.shape_cast %47 : vector<4x8x4xf32> to vector<32x4xf32>
    %c0_26 = arith.constant 0 : index
    %c17 = arith.constant 17 : index
    %c0_27 = arith.constant 0 : index
    %49 = vector.load %arg12[%c0_26, %c17, %c0_27] : memref<5x32x8xf32, #tpu.memory_space<vmem>>, vector<4x8x4xf32>
    %50 = vector.shape_cast %49 : vector<4x8x4xf32> to vector<32x4xf32>
    %c0_28 = arith.constant 0 : index
    %c17_29 = arith.constant 17 : index
    %c4_30 = arith.constant 4 : index
    %51 = vector.load %arg12[%c0_28, %c17_29, %c4_30] : memref<5x32x8xf32, #tpu.memory_space<vmem>>, vector<4x8x4xf32>
    %52 = vector.shape_cast %51 : vector<4x8x4xf32> to vector<32x4xf32>
    %c1_31 = arith.constant 1 : index
    %c0_32 = arith.constant 0 : index
    %c4_33 = arith.constant 4 : index
    %53 = vector.load %arg12[%c1_31, %c0_32, %c4_33] : memref<5x32x8xf32, #tpu.memory_space<vmem>>, vector<4x8x4xf32>
    %54 = vector.shape_cast %53 : vector<4x8x4xf32> to vector<32x4xf32>
    %c1_34 = arith.constant 1 : index
    %c1_35 = arith.constant 1 : index
    %c0_36 = arith.constant 0 : index
    %55 = vector.load %arg12[%c1_34, %c1_35, %c0_36] : memref<5x32x8xf32, #tpu.memory_space<vmem>>, vector<4x8x4xf32>
    %56 = vector.shape_cast %55 : vector<4x8x4xf32> to vector<32x4xf32>
    %c1_37 = arith.constant 1 : index
    %c1_38 = arith.constant 1 : index
    %c4_39 = arith.constant 4 : index
    %57 = vector.load %arg12[%c1_37, %c1_38, %c4_39] : memref<5x32x8xf32, #tpu.memory_space<vmem>>, vector<4x8x4xf32>
    %58 = vector.shape_cast %57 : vector<4x8x4xf32> to vector<32x4xf32>
    %c1_40 = arith.constant 1 : index
    %c16_41 = arith.constant 16 : index
    %c4_42 = arith.constant 4 : index
    %59 = vector.load %arg12[%c1_40, %c16_41, %c4_42] : memref<5x32x8xf32, #tpu.memory_space<vmem>>, vector<4x8x4xf32>
    %60 = vector.shape_cast %59 : vector<4x8x4xf32> to vector<32x4xf32>
    %c1_43 = arith.constant 1 : index
    %c17_44 = arith.constant 17 : index
    %c0_45 = arith.constant 0 : index
    %61 = vector.load %arg12[%c1_43, %c17_44, %c0_45] : memref<5x32x8xf32, #tpu.memory_space<vmem>>, vector<4x8x4xf32>
    %62 = vector.shape_cast %61 : vector<4x8x4xf32> to vector<32x4xf32>
    %c1_46 = arith.constant 1 : index
    %c17_47 = arith.constant 17 : index
    %c4_48 = arith.constant 4 : index
    %63 = vector.load %arg12[%c1_46, %c17_47, %c4_48] : memref<5x32x8xf32, #tpu.memory_space<vmem>>, vector<4x8x4xf32>
    %64 = vector.shape_cast %63 : vector<4x8x4xf32> to vector<32x4xf32>
    %65 = tpu.concatenate %48, %50, %52, %54, %56, %58, %60, %62, %64 in 1 : vector<32x4xf32>, vector<32x4xf32>, vector<32x4xf32>, vector<32x4xf32>, vector<32x4xf32>, vector<32x4xf32>, vector<32x4xf32>, vector<32x4xf32>, vector<32x4xf32> -> vector<32x36xf32>
    %cst_49 = arith.constant dense<0.000000e+00> : vector<32x4xf32>
    %66 = tpu.matmul %65, %2, %cst_49 {dimension_numbers = #tpu.dot_dimension_numbers<[1], [0], [0], [1], [0, 0, 1, 1], [], []>} : vector<32x36xf32>, vector<36x4xf32>, vector<32x4xf32> -> vector<32x4xf32>
    %67 = vector.broadcast %5 : vector<1x4xf32> to vector<32x4xf32>
    %68 = arith.addf %66, %67 : vector<32x4xf32>
    %69 = arith.negf %68 : vector<32x4xf32>
    %70 = math.exp %69 : vector<32x4xf32>
    %cst_50 = arith.constant 1.000000e+00 : f32
    %71 = vector.broadcast %cst_50 : f32 to vector<32x4xf32>
    %72 = arith.addf %71, %70 : vector<32x4xf32>
    %73 = arith.divf %71, %72 : vector<32x4xf32>
    %74 = arith.mulf %68, %73 : vector<32x4xf32>
    %75 = tpu.concatenate %46, %74 in 1 : vector<32x4xf32>, vector<32x4xf32> -> vector<32x8xf32>
    %76 = vector.shape_cast %75 : vector<32x8xf32> to vector<4x8x8xf32>
    %c0_51 = arith.constant 0 : index
    %c0_52 = arith.constant 0 : index
    %c0_53 = arith.constant 0 : index
    %c0_54 = arith.constant 0 : index
    %77 = vector.load %arg11[%c0_51, %c0_52, %c0_53, %c0_54] : memref<1x4x8x8xf32, #tpu.memory_space<vmem>>, vector<1x4x8x8xf32>
    %78 = vector.shape_cast %77 : vector<1x4x8x8xf32> to vector<4x8x8xf32>
    %79 = vector.shape_cast %76 : vector<4x8x8xf32> to vector<1x4x8x8xf32>
    tpu.vector_store %arg11[%c0_51, %c0_52, %c0_53, %c0_54], %79 {strides = array<i32>} : memref<1x4x8x8xf32, #tpu.memory_space<vmem>>, vector<1x4x8x8xf32>,
    return
  }
  func.func @transform_0(%arg0: i32, %arg1: i32) -> (i32, i32, i32, i32) {
    %c0_i32 = arith.constant 0 : i32
    %c0_i32_0 = arith.constant 0 : i32
    %c0_i32_1 = arith.constant 0 : i32
    return %arg0, %arg1, %c0_i32, %c0_i32_0 : i32, i32, i32, i32
  }
  func.func @transform_1(%arg0: i32, %arg1: i32) -> (i32, i32, i32, i32) {
    %c4_i32 = arith.constant 4 : i32
    %0 = arith.muli %arg1, %c4_i32 : i32
    %c1_i32 = arith.constant 1 : i32
    %1 = arith.subi %0, %c1_i32 : i32
    %c0_i32 = arith.constant 0 : i32
    %2 = arith.maxsi %1, %c0_i32 : i32
    %c0_i32_0 = arith.constant 0 : i32
    %c0_i32_1 = arith.constant 0 : i32
    %c0_i32_2 = arith.constant 0 : i32
    return %arg0, %2, %c0_i32_0, %c0_i32_1 : i32, i32, i32, i32
  }
  func.func @transform_2(%arg0: i32, %arg1: i32) -> (i32, i32) {
    %c0_i32 = arith.constant 0 : i32
    %c0_i32_0 = arith.constant 0 : i32
    %c0_i32_1 = arith.constant 0 : i32
    return %c0_i32, %c0_i32_0 : i32, i32
  }
  func.func @transform_3(%arg0: i32, %arg1: i32) -> (i32, i32) {
    %c0_i32 = arith.constant 0 : i32
    %c0_i32_0 = arith.constant 0 : i32
    %c0_i32_1 = arith.constant 0 : i32
    return %c0_i32, %c0_i32_0 : i32, i32
  }
  func.func @transform_4(%arg0: i32, %arg1: i32) -> (i32, i32) {
    %c0_i32 = arith.constant 0 : i32
    %c0_i32_0 = arith.constant 0 : i32
    %c0_i32_1 = arith.constant 0 : i32
    return %c0_i32, %c0_i32_0 : i32, i32
  }
  func.func @transform_5(%arg0: i32, %arg1: i32) -> (i32, i32) {
    %c0_i32 = arith.constant 0 : i32
    %c0_i32_0 = arith.constant 0 : i32
    %c0_i32_1 = arith.constant 0 : i32
    return %c0_i32, %c0_i32_0 : i32, i32
  }
  func.func @transform_6(%arg0: i32, %arg1: i32) -> (i32, i32) {
    %c0_i32 = arith.constant 0 : i32
    %c0_i32_0 = arith.constant 0 : i32
    %c0_i32_1 = arith.constant 0 : i32
    return %c0_i32, %c0_i32_0 : i32, i32
  }
  func.func @transform_7(%arg0: i32, %arg1: i32) -> (i32, i32) {
    %c0_i32 = arith.constant 0 : i32
    %c0_i32_0 = arith.constant 0 : i32
    %c0_i32_1 = arith.constant 0 : i32
    return %c0_i32, %c0_i32_0 : i32, i32
  }
  func.func @transform_8(%arg0: i32, %arg1: i32) -> (i32, i32) {
    %c0_i32 = arith.constant 0 : i32
    %c0_i32_0 = arith.constant 0 : i32
    %c0_i32_1 = arith.constant 0 : i32
    return %c0_i32, %c0_i32_0 : i32, i32
  }
  func.func @transform_9(%arg0: i32, %arg1: i32) -> (i32, i32, i32, i32) {
    %c0_i32 = arith.constant 0 : i32
    %c0_i32_0 = arith.constant 0 : i32
    %c0_i32_1 = arith.constant 0 : i32
    return %arg0, %arg1, %c0_i32, %c0_i32_0 : i32, i32, i32, i32
  }
}

</mosaic_0001>

<llo_original>
// kernel: tile.8
$region0: #{tile.8}
  #allocation0 [shape = 's32[1]{0}', space=sflag, size = 0x4, scoped, tag = 'scoped memory for tile.8']
  %s0 = inlined_call_operand.vmem [shape: f32[16], index: 0, kind: input, shape index: {}]
  %s1 = inlined_call_operand.vmem [shape: f32[2,16], index: 1, kind: output, shape index: {}]
  // Predicated region
  $region2: #{tile.8} parent=0 // pred_check
    _
  $region3: #{tile.8} parent=0 // pred_check_branch
    %3 = sbr.rel (0) target = $region5
  $region4: #{tile.8} parent=0 // pred_region
    _
  $region5: #{tile.8} parent=0 // pred_fallthru
    _
  %v4 = vld [vmem:[%s0] ss:$0 sm:$0xff]
  %5 = vst [vmem:[%s1] sm:$0x3] %v4

// kernel: mul.34
$region0: #{mul.34}
  %s0 = inlined_call_operand.vmem [shape: f32[2,16], index: 0, kind: input, shape index: {}]
  %s1 = inlined_call_operand.vmem [shape: f32[32], index: 1, kind: output, shape index: {}]
  $region1: #{mul.34} parent=0
    #allocation0 [shape = 'u8[4096]{0}', space=vmem, size = 0x1000, scoped, tag = 'scoped mem for output reshape']
    #allocation1 [shape = 'u8[4096]{0}', space=vmem, size = 0x1000, scoped, tag = 'scoped mem for input reshape']
    %s3 = sshllo.u32 0, 2
    %v4 = vld [vmem:[%s0] sm:%s3]
    %5 = vst [vmem:[#allocation1] sm:%s3] %v4
    %v6 = vld [vmem:[#allocation1] sm:$0x1]
    %vm7 = vcmask 130048
    %8 = vst.msk [vmem:[#allocation0] sm:$0x1] %vm7, %v6
    %s9 = scalar_lea.vmem [#allocation1], 1
    %v10 = vld [vmem:[%s9] sm:$0x1]
    %11 = vrot.lane.b32.xlu0 %v10, 16
    %v12 = vpop.permute.xlu0 %11
    %vm13 = vcmask 261248
    %14 = vst.msk [vmem:[#allocation0] sm:$0x1] %vm13, %v12
    %s16 = sshllo.u32 0, 1
    %v18 = vld [vmem:[#allocation0] sm:%s16]
    %s19 = sshllo.u32 0, 1
    %20 = vst [vmem:[%s1] sm:%s19] %v18

// kernel: mul.35
$region0: #{mul.35}
  #allocation0 [shape = 's32[1]{0}', space=sflag, size = 0x4, scoped, tag = 'scoped memory for mul.35']
  %s0 = inlined_call_operand.vmem [shape: f32[32], index: 0, kind: input, shape index: {}]
  %s1 = inlined_call_operand.vmem [shape: f32[32,8], index: 1, kind: output, shape index: {}]
  // Predicated region
  $region2: #{mul.35} parent=0 // pred_check
    _
  $region3: #{mul.35} parent=0 // pred_check_branch
    %3 = sbr.rel (0) target = $region5
  $region4: #{mul.35} parent=0 // pred_region
    _
  $region5: #{mul.35} parent=0 // pred_fallthru
    _
  %v4 = vld [vmem:[%s0] ss:$0 sm:$0xff]
  %6 = vbcast.lane.b32.xlu0 %v4, 256
  %v7 = vpop.permute.xlu0 %6
  %8 = vst [vmem:[%s1] sm:$0xff] %v7
  %v9 = vld [vmem:[%s0] ss:$0 sm:$0xff]
  %s11 = sor.u32 256, 8
  %12 = vbcast.lane.b32.xlu0 %v9, %s11
  %v13 = vpop.permute.xlu0 %12
  %s14 = scalar_lea.vmem %s1, 8
  %15 = vst [vmem:[%s14] sm:$0xff] %v13
  %v16 = vld [vmem:[%s0] ss:$0 sm:$0xff]
  %s18 = sor.u32 256, 16
  %19 = vbcast.lane.b32.xlu0 %v16, %s18
  %v20 = vpop.permute.xlu0 %19
  %s21 = scalar_lea.vmem %s1, 16
  %22 = vst [vmem:[%s21] sm:$0xff] %v20
  %v23 = vld [vmem:[%s0] ss:$0 sm:$0xff]
  %s25 = sor.u32 256, 24
  %26 = vbcast.lane.b32.xlu0 %v23, %s25
  %v27 = vpop.permute.xlu0 %26
  %s28 = scalar_lea.vmem %s1, 24
  %29 = vst [vmem:[%s28] sm:$0xff] %v27

// kernel: mp_forward.1
$region0: #{mp_forward.1}
  #allocation0 [shape = 'u32[]', space=smem, size = 0x4, offset = 0x4, fixed_abs, tag = 'smem constant byte address 0x4 - core index']
  #allocation1 [shape = 'u32[144,128]{1,0:T(1,128)}', space=vmem, size = 0x12000, scoped, tag = 'internal scratch']
  #allocation2 [shape = 'f32[5,32,8]{2,1,0:T(8,128)}', space=vmem, size = 0x14000, scoped, tag = 'scratch operand']
  %s0 = inlined_call_operand.vmem [shape: f32[2,8,32,8], index: 0, kind: input, shape index: {}, may-alias: {0,1}]
  %s1 = inlined_call_operand.vmem [shape: f32[2,8,32,8], index: 1, kind: input, shape index: {}, may-alias: {0,1}]
  %s2 = inlined_call_operand.vmem [shape: f32[4,4], index: 2, kind: input, shape index: {}]
  %s3 = inlined_call_operand.vmem [shape: f32[1,4], index: 3, kind: input, shape index: {}]
  %s4 = inlined_call_operand.vmem [shape: f32[8,8], index: 4, kind: input, shape index: {}]
  %s5 = inlined_call_operand.vmem [shape: f32[1,8], index: 5, kind: input, shape index: {}]
  %s6 = inlined_call_operand.vmem [shape: f32[36,4], index: 6, kind: input, shape index: {}]
  %s7 = inlined_call_operand.vmem [shape: f32[1,4], index: 7, kind: input, shape index: {}]
  %s8 = inlined_call_operand.vmem [shape: f32[32,8], index: 8, kind: input, shape index: {}]
  %s9 = inlined_call_operand.vmem [shape: f32[2,8,8,8], index: 9, kind: output, shape index: {}]
  %s10 = sld [smem:[#allocation0]]
  $region77: #{mp_forward.1} parent=0
    _
  %s12 = ssub.s32 1, %s10
  %s13 = scalar_select 0, %s12, %s10
  loop: start=0, step=1, limit=6
  $region2: #{mp_forward.1} parent=0 // loop_pre_header
    _
  $region3: #{mp_forward.1} parent=0 // loop_header
    %s15 = sphi 0, %s19
    %p16 = scmp.ge.s32.totalorder %s15, 6
    %s22 = sphi 0, %s34
    %s23 = sphi 0, %s30
    %s24 = sphi 0, %s22
    %s25 = sphi 0, %s23
    %s26 = sphi 0, %s24
    %s27 = sphi 0, %s25
    %s39 = sphi 0, %s41
    %s42 = sphi 0, %s39
    %s43 = sphi 0, %s42
    %s59 = sphi 0, %s43
    %s75 = sphi 0, %s77
    %s78 = sphi 0, %s75
    %s79 = sphi 0, %s78
    %s95 = sphi 0, %s79
    %s99 = sphi 0, %s99
    %s101 = sphi 0, %s99
    %s102 = sphi 0, %s101
    %s116 = sphi 0, %s102
    %s120 = sphi 0, %s120
    %s122 = sphi 0, %s120
    %s123 = sphi 0, %s122
    %s137 = sphi 0, %s123
    %s141 = sphi 0, %s141
    %s143 = sphi 0, %s141
    %s144 = sphi 0, %s143
    %s158 = sphi 0, %s144
    %s162 = sphi 0, %s162
    %s164 = sphi 0, %s162
    %s165 = sphi 0, %s164
    %s179 = sphi 0, %s165
    %s183 = sphi 0, %s183
    %s185 = sphi 0, %s183
    %s186 = sphi 0, %s185
    %s200 = sphi 0, %s186
    %s204 = sphi 0, %s204
    %s206 = sphi 0, %s204
    %s207 = sphi 0, %s206
    %s221 = sphi 0, %s207
    %s225 = sphi 0, %s225
    %s227 = sphi 0, %s225
    %s228 = sphi 0, %s227
    %s242 = sphi 0, %s228
    %s250 = sphi 0, %s252
    %s253 = sphi 0, %s250
    %s254 = sphi 0, %s253
    %s270 = sphi 0, %s254
  $region4: #{mp_forward.1} parent=0 // loop_header_branch
    %18 = sbr.rel (%p16) target = $region8
  $region5: #{mp_forward.1} parent=0 // loop_body
    %s20 = ssub.s32 %s15, 1
    %s21 = ssub.s32 %s15, 2
    %s28 = sadd.s32 1, %s23
    %p29 = scmp.ge.s32.totalorder %s28, 2
    %s30 = scalar_select %p29, 0, %s28
    %s31 = sadd.s32 1, %s22
    %s32 = scalar_select %p29, %s31, %s22
    %p33 = scmp.ge.s32.totalorder %s32, 2
    %s34 = scalar_select %p33, 0, %s32
    %s35 = ssub.s32 %s22, %s34
    %s36 = ssub.s32 %s23, %s30
    %s37 = sor.u32 %s35, %s36
    %p38 = scmp.eq.s32.totalorder %s37, 0
    %s40 = sadd.s32 %s39, 1
    %s41 = scalar_select %p38, %s39, %s40
    %p44 = pneg %p38
    %p45 = scmp.eq.s32.totalorder %s15, 3
    %p46 = por %p44, %p45
    %p47 = scmp.ne.s32.totalorder %s39, %s42
    %p48 = scmp.eq.s32.totalorder %s15, 0
    %p49 = por %p47, %p48
    %p50 = scmp.ne.s32.totalorder %s39, %s42
    %p51 = scmp.eq.s32.totalorder %s20, 3
    %p52 = por %p50, %p51
    %p53 = scmp.ne.s32.totalorder %s42, %s43
    %p54 = scmp.eq.s32.totalorder %s20, 0
    %p55 = por %p53, %p54
    %p56 = scmp.ne.s32.totalorder %s42, %s43
    %p57 = scmp.eq.s32.totalorder %s21, 3
    %p58 = por %p56, %p57
    %p60 = scmp.ne.s32.totalorder %s43, %s59
    %p61 = scmp.eq.s32.totalorder %s21, 0
    %p62 = por %p60, %p61
    %s63 = smul.u32 %s23, 4
    %s64 = ssub.s32 %s63, 1
    %p65 = scmp.gt.s32.totalorder %s64, 0
    %s66 = scalar_select %p65, %s64, 0
    %s67 = smul.u32 %s30, 4
    %s68 = ssub.s32 %s67, 1
    %p69 = scmp.gt.s32.totalorder %s68, 0
    %s70 = scalar_select %p69, %s68, 0
    %s71 = ssub.s32 %s22, %s34
    %s72 = ssub.s32 %s66, %s70
    %s73 = sor.u32 %s71, %s72
    %p74 = scmp.eq.s32.totalorder %s73, 0
    %s76 = sadd.s32 %s75, 1
    %s77 = scalar_select %p74, %s75, %s76
    %p80 = pneg %p74
    %p81 = scmp.eq.s32.totalorder %s15, 3
    %p82 = por %p80, %p81
    %p83 = scmp.ne.s32.totalorder %s75, %s78
    %p84 = scmp.eq.s32.totalorder %s15, 0
    %p85 = por %p83, %p84
    %p86 = scmp.ne.s32.totalorder %s75, %s78
    %p87 = scmp.eq.s32.totalorder %s20, 3
    %p88 = por %p86, %p87
    %p89 = scmp.ne.s32.totalorder %s78, %s79
    %p90 = scmp.eq.s32.totalorder %s20, 0
    %p91 = por %p89, %p90
    %p92 = scmp.ne.s32.totalorder %s78, %s79
    %p93 = scmp.eq.s32.totalorder %s21, 3
    %p94 = por %p92, %p93
    %p96 = scmp.ne.s32.totalorder %s79, %s95
    %p97 = scmp.eq.s32.totalorder %s21, 0
    %p98 = por %p96, %p97
    %s100 = sadd.s32 %s99, 1
    %p103 = scmp.eq.s32.totalorder %s15, 3
    %p104 = scmp.ne.s32.totalorder %s99, %s101
    %p105 = scmp.eq.s32.totalorder %s15, 0
    %p106 = por %p104, %p105
    %p107 = scmp.ne.s32.totalorder %s99, %s101
    %p108 = scmp.eq.s32.totalorder %s20, 3
    %p109 = por %p107, %p108
    %p110 = scmp.ne.s32.totalorder %s101, %s102
    %p111 = scmp.eq.s32.totalorder %s20, 0
    %p112 = por %p110, %p111
    %p113 = scmp.ne.s32.totalorder %s101, %s102
    %p114 = scmp.eq.s32.totalorder %s21, 3
    %p115 = por %p113, %p114
    %p117 = scmp.ne.s32.totalorder %s102, %s116
    %p118 = scmp.eq.s32.totalorder %s21, 0
    %p119 = por %p117, %p118
    %s121 = sadd.s32 %s120, 1
    %p124 = scmp.eq.s32.totalorder %s15, 3
    %p125 = scmp.ne.s32.totalorder %s120, %s122
    %p126 = scmp.eq.s32.totalorder %s15, 0
    %p127 = por %p125, %p126
    %p128 = scmp.ne.s32.totalorder %s120, %s122
    %p129 = scmp.eq.s32.totalorder %s20, 3
    %p130 = por %p128, %p129
    %p131 = scmp.ne.s32.totalorder %s122, %s123
    %p132 = scmp.eq.s32.totalorder %s20, 0
    %p133 = por %p131, %p132
    %p134 = scmp.ne.s32.totalorder %s122, %s123
    %p135 = scmp.eq.s32.totalorder %s21, 3
    %p136 = por %p134, %p135
    %p138 = scmp.ne.s32.totalorder %s123, %s137
    %p139 = scmp.eq.s32.totalorder %s21, 0
    %p140 = por %p138, %p139
    %s142 = sadd.s32 %s141, 1
    %p145 = scmp.eq.s32.totalorder %s15, 3
    %p146 = scmp.ne.s32.totalorder %s141, %s143
    %p147 = scmp.eq.s32.totalorder %s15, 0
    %p148 = por %p146, %p147
    %p149 = scmp.ne.s32.totalorder %s141, %s143
    %p150 = scmp.eq.s32.totalorder %s20, 3
    %p151 = por %p149, %p150
    %p152 = scmp.ne.s32.totalorder %s143, %s144
    %p153 = scmp.eq.s32.totalorder %s20, 0
    %p154 = por %p152, %p153
    %p155 = scmp.ne.s32.totalorder %s143, %s144
    %p156 = scmp.eq.s32.totalorder %s21, 3
    %p157 = por %p155, %p156
    %p159 = scmp.ne.s32.totalorder %s144, %s158
    %p160 = scmp.eq.s32.totalorder %s21, 0
    %p161 = por %p159, %p160
    %s163 = sadd.s32 %s162, 1
    %p166 = scmp.eq.s32.totalorder %s15, 3
    %p167 = scmp.ne.s32.totalorder %s162, %s164
    %p168 = scmp.eq.s32.totalorder %s15, 0
    %p169 = por %p167, %p168
    %p170 = scmp.ne.s32.totalorder %s162, %s164
    %p171 = scmp.eq.s32.totalorder %s20, 3
    %p172 = por %p170, %p171
    %p173 = scmp.ne.s32.totalorder %s164, %s165
    %p174 = scmp.eq.s32.totalorder %s20, 0
    %p175 = por %p173, %p174
    %p176 = scmp.ne.s32.totalorder %s164, %s165
    %p177 = scmp.eq.s32.totalorder %s21, 3
    %p178 = por %p176, %p177
    %p180 = scmp.ne.s32.totalorder %s165, %s179
    %p181 = scmp.eq.s32.totalorder %s21, 0
    %p182 = por %p180, %p181
    %s184 = sadd.s32 %s183, 1
    %p187 = scmp.eq.s32.totalorder %s15, 3
    %p188 = scmp.ne.s32.totalorder %s183, %s185
    %p189 = scmp.eq.s32.totalorder %s15, 0
    %p190 = por %p188, %p189
    %p191 = scmp.ne.s32.totalorder %s183, %s185
    %p192 = scmp.eq.s32.totalorder %s20, 3
    %p193 = por %p191, %p192
    %p194 = scmp.ne.s32.totalorder %s185, %s186
    %p195 = scmp.eq.s32.totalorder %s20, 0
    %p196 = por %p194, %p195
    %p197 = scmp.ne.s32.totalorder %s185, %s186
    %p198 = scmp.eq.s32.totalorder %s21, 3
    %p199 = por %p197, %p198
    %p201 = scmp.ne.s32.totalorder %s186, %s200
    %p202 = scmp.eq.s32.totalorder %s21, 0
    %p203 = por %p201, %p202
    %s205 = sadd.s32 %s204, 1
    %p208 = scmp.eq.s32.totalorder %s15, 3
    %p209 = scmp.ne.s32.totalorder %s204, %s206
    %p210 = scmp.eq.s32.totalorder %s15, 0
    %p211 = por %p209, %p210
    %p212 = scmp.ne.s32.totalorder %s204, %s206
    %p213 = scmp.eq.s32.totalorder %s20, 3
    %p214 = por %p212, %p213
    %p215 = scmp.ne.s32.totalorder %s206, %s207
    %p216 = scmp.eq.s32.totalorder %s20, 0
    %p217 = por %p215, %p216
    %p218 = scmp.ne.s32.totalorder %s206, %s207
    %p219 = scmp.eq.s32.totalorder %s21, 3
    %p220 = por %p218, %p219
    %p222 = scmp.ne.s32.totalorder %s207, %s221
    %p223 = scmp.eq.s32.totalorder %s21, 0
    %p224 = por %p222, %p223
    %s226 = sadd.s32 %s225, 1
    %p229 = scmp.eq.s32.totalorder %s15, 3
    %p230 = scmp.ne.s32.totalorder %s225, %s227
    %p231 = scmp.eq.s32.totalorder %s15, 0
    %p232 = por %p230, %p231
    %p233 = scmp.ne.s32.totalorder %s225, %s227
    %p234 = scmp.eq.s32.totalorder %s20, 3
    %p235 = por %p233, %p234
    %p236 = scmp.ne.s32.totalorder %s227, %s228
    %p237 = scmp.eq.s32.totalorder %s20, 0
    %p238 = por %p236, %p237
    %p239 = scmp.ne.s32.totalorder %s227, %s228
    %p240 = scmp.eq.s32.totalorder %s21, 3
    %p241 = por %p239, %p240
    %p243 = scmp.ne.s32.totalorder %s228, %s242
    %p244 = scmp.eq.s32.totalorder %s21, 0
    %p245 = por %p243, %p244
    %s246 = ssub.s32 %s22, %s34
    %s247 = ssub.s32 %s23, %s30
    %s248 = sor.u32 %s246, %s247
    %p249 = scmp.eq.s32.totalorder %s248, 0
    %s251 = sadd.s32 %s250, 1
    %s252 = scalar_select %p249, %s250, %s251
    %p255 = pneg %p249
    %p256 = scmp.eq.s32.totalorder %s15, 3
    %p257 = por %p255, %p256
    %p258 = scmp.ne.s32.totalorder %s250, %s253
    %p259 = scmp.eq.s32.totalorder %s15, 0
    %p260 = por %p258, %p259
    %p261 = scmp.ne.s32.totalorder %s250, %s253
    %p262 = scmp.eq.s32.totalorder %s20, 3
    %p263 = por %p261, %p262
    %p264 = scmp.ne.s32.totalorder %s253, %s254
    %p265 = scmp.eq.s32.totalorder %s20, 0
    %p266 = por %p264, %p265
    %p267 = scmp.ne.s32.totalorder %s253, %s254
    %p268 = scmp.eq.s32.totalorder %s21, 3
    %p269 = por %p267, %p268
    %p271 = scmp.ne.s32.totalorder %s254, %s270
    %p272 = scmp.eq.s32.totalorder %s21, 0
    %p273 = por %p271, %p272
    %p274 = scmp.le.s32.totalorder 1, %s15
    %p275 = scmp.lt.s32.totalorder %s15, 5
    %p276 = pnand %p274, %p275
    %p277 = pneg %p276
    // Predicated region
    $region9: #{mp_forward.1} parent=5 // pred_check
      _
    $region10: #{mp_forward.1} parent=5 // pred_check_branch
      %279 = sbr.rel (%p276) target = $region12
    $region11: #{mp_forward.1} parent=5 // pred_region
      %s280 = ssub.s32 %s15, 1
      // Predicated region
      $region13: #{mp_forward.1} parent=11 // pred_check
        %p281 = pneg %p112
      $region14: #{mp_forward.1} parent=11 // pred_check_branch
        %283 = sbr.rel (%p281) target = $region16
      $region15: #{mp_forward.1} parent=11 // pred_region
        _
      $region16: #{mp_forward.1} parent=11 // pred_fallthru
        _
      // Predicated region
      $region17: #{mp_forward.1} parent=11 // pred_check
        %p284 = pneg %p133
      $region18: #{mp_forward.1} parent=11 // pred_check_branch
        %286 = sbr.rel (%p284) target = $region20
      $region19: #{mp_forward.1} parent=11 // pred_region
        _
      $region20: #{mp_forward.1} parent=11 // pred_fallthru
        _
      // Predicated region
      $region21: #{mp_forward.1} parent=11 // pred_check
        %p287 = pneg %p154
      $region22: #{mp_forward.1} parent=11 // pred_check_branch
        %289 = sbr.rel (%p287) target = $region24
      $region23: #{mp_forward.1} parent=11 // pred_region
        _
      $region24: #{mp_forward.1} parent=11 // pred_fallthru
        _
      // Predicated region
      $region25: #{mp_forward.1} parent=11 // pred_check
        %p290 = pneg %p175
      $region26: #{mp_forward.1} parent=11 // pred_check_branch
        %292 = sbr.rel (%p290) target = $region28
      $region27: #{mp_forward.1} parent=11 // pred_region
        _
      $region28: #{mp_forward.1} parent=11 // pred_fallthru
        _
      // Predicated region
      $region29: #{mp_forward.1} parent=11 // pred_check
        %p293 = pneg %p196
      $region30: #{mp_forward.1} parent=11 // pred_check_branch
        %295 = sbr.rel (%p293) target = $region32
      $region31: #{mp_forward.1} parent=11 // pred_region
        _
      $region32: #{mp_forward.1} parent=11 // pred_fallthru
        _
      // Predicated region
      $region33: #{mp_forward.1} parent=11 // pred_check
        %p296 = pneg %p217
      $region34: #{mp_forward.1} parent=11 // pred_check_branch
        %298 = sbr.rel (%p296) target = $region36
      $region35: #{mp_forward.1} parent=11 // pred_region
        _
      $region36: #{mp_forward.1} parent=11 // pred_fallthru
        _
      // Predicated region
      $region37: #{mp_forward.1} parent=11 // pred_check
        %p299 = pneg %p238
      $region38: #{mp_forward.1} parent=11 // pred_check_branch
        %301 = sbr.rel (%p299) target = $region40
      $region39: #{mp_forward.1} parent=11 // pred_region
        _
      $region40: #{mp_forward.1} parent=11 // pred_fallthru
        _
    $region12: #{mp_forward.1} parent=5 // pred_fallthru
      _
    %p302 = scmp.lt.s32.totalorder %s15, 4
    // Predicated region
    $region41: #{mp_forward.1} parent=5 // pred_check
      %p303 = pneg %p302
    $region42: #{mp_forward.1} parent=5 // pred_check_branch
      %305 = sbr.rel (%p303) target = $region44
    $region43: #{mp_forward.1} parent=5 // pred_region
      // Predicated region
      $region45: #{mp_forward.1} parent=43 // pred_check
        %p306 = pneg %p49
      $region46: #{mp_forward.1} parent=43 // pred_check_branch
        %308 = sbr.rel (%p306) target = $region48
      $region47: #{mp_forward.1} parent=43 // pred_region
        %s309 = smul.u32 4, %s23
        %p310 = scmp.lt.s32.totalorder %s22, 1
        %s311 = scalar_select %p310, %s22, 1
        %p312 = scmp.lt.s32.totalorder %s309, 7
        %s313 = scalar_select %p312, %s309, 7
        %s314 = smul.addr %s313, 4
        %s315 = smul.addr %s311, 32
        %s316 = sadd.s32 %s314, %s315
        %s317 = smul.addr %s316, 8
        %s318 = scalar_lea.vmem %s0, %s317
        %s319 = smul.u32 4, %s23
      $region48: #{mp_forward.1} parent=43 // pred_fallthru
        _
      // Predicated region
      $region49: #{mp_forward.1} parent=43 // pred_check
        %p320 = pneg %p85
      $region50: #{mp_forward.1} parent=43 // pred_check_branch
        %322 = sbr.rel (%p320) target = $region52
      $region51: #{mp_forward.1} parent=43 // pred_region
        %s323 = smul.u32 %s23, 4
        %s324 = ssub.s32 %s323, 1
        %p325 = scmp.gt.s32.totalorder %s324, 0
        %s326 = scalar_select %p325, %s324, 0
        %p327 = scmp.lt.s32.totalorder %s22, 1
        %s328 = scalar_select %p327, %s22, 1
        %p329 = scmp.lt.s32.totalorder %s326, 7
        %s330 = scalar_select %p329, %s326, 7
        %s331 = smul.addr %s330, 4
        %s332 = smul.addr %s328, 32
        %s333 = sadd.s32 %s331, %s332
        %s334 = smul.addr %s333, 8
        %s335 = scalar_lea.vmem %s1, %s334
        %s336 = smul.u32 %s23, 4
        %s337 = ssub.s32 %s336, 1
        %p338 = scmp.gt.s32.totalorder %s337, 0
        %s339 = scalar_select %p338, %s337, 0
      $region52: #{mp_forward.1} parent=43 // pred_fallthru
        _
    $region44: #{mp_forward.1} parent=5 // pred_fallthru
      _
    %p340 = scmp.le.s32.totalorder 1, %s15
    %p341 = scmp.lt.s32.totalorder %s15, 5
    %p342 = pnand %p340, %p341
    %p343 = pneg %p342
    // Predicated region
    $region53: #{mp_forward.1} parent=5 // pred_check
      _
    $region54: #{mp_forward.1} parent=5 // pred_check_branch
      %345 = sbr.rel (%p342) target = $region56
    $region55: #{mp_forward.1} parent=5 // pred_region
      %s346 = ssub.s32 %s15, 1
      %s347 = smul.u32 4, %s25
      %p348 = scmp.lt.s32.totalorder %s24, 1
      %s349 = scalar_select %p348, %s24, 1
      %p350 = scmp.lt.s32.totalorder %s347, 7
      %s351 = scalar_select %p350, %s347, 7
      %s352 = smul.addr %s351, 4
      %s353 = smul.addr %s349, 32
      %s354 = sadd.s32 %s352, %s353
      %s355 = smul.addr %s354, 8
      %s356 = scalar_lea.vmem %s0, %s355
      %p357 = pneg %p55
      %p358 = pneg %p52
      %s359 = smul.u32 %s25, 4
      %s360 = ssub.s32 %s359, 1
      %p361 = scmp.gt.s32.totalorder %s360, 0
      %s362 = scalar_select %p361, %s360, 0
      %p363 = scmp.lt.s32.totalorder %s24, 1
      %s364 = scalar_select %p363, %s24, 1
      %p365 = scmp.lt.s32.totalorder %s362, 7
      %s366 = scalar_select %p365, %s362, 7
      %s367 = smul.addr %s366, 4
      %s368 = smul.addr %s364, 32
      %s369 = sadd.s32 %s367, %s368
      %s370 = smul.addr %s369, 8
      %s371 = scalar_lea.vmem %s1, %s370
      %p372 = pneg %p91
      %p373 = pneg %p88
      %p374 = pneg %p112
      %p375 = pneg %p109
      %p376 = pneg %p133
      %p377 = pneg %p130
      %p378 = pneg %p154
      %p379 = pneg %p151
      %p380 = pneg %p175
      %p381 = pneg %p172
      %p382 = pneg %p196
      %p383 = pneg %p193
      %p384 = pneg %p217
      %p385 = pneg %p214
      %p386 = pneg %p238
      %p387 = pneg %p235
      %p388 = pneg %p266
      %p389 = pneg %p263
      %s390 = smul.u32 4, %s25
      %p391 = scmp.lt.s32.totalorder %s24, 1
      %s392 = scalar_select %p391, %s24, 1
      %p393 = scmp.lt.s32.totalorder %s390, 7
      %s394 = scalar_select %p393, %s390, 7
      %s395 = smul.addr %s392, 8
      %s396 = sadd.s32 %s394, %s395
      %s397 = smul.addr %s396, 8
      %s398 = scalar_lea.vmem %s9, %s397
      %s399 = smul.u32 4, %s25
      %p400 = scmp.lt.s32.totalorder %s24, 1
      %s401 = scalar_select %p400, %s24, 1
      %p402 = scmp.lt.s32.totalorder %s399, 7
      %s403 = scalar_select %p402, %s399, 7
      %s404 = smul.addr %s403, 4
      %s405 = smul.addr %s401, 32
      %s406 = sadd.s32 %s404, %s405
      %s407 = smul.addr %s406, 8
      %s408 = scalar_lea.vmem %s0, %s407
      %s409 = smul.u32 4, %s25
      %s410 = smul.u32 %s25, 4
      %s411 = ssub.s32 %s410, 1
      %p412 = scmp.gt.s32.totalorder %s411, 0
      %s413 = scalar_select %p412, %s411, 0
      %p414 = scmp.lt.s32.totalorder %s24, 1
      %s415 = scalar_select %p414, %s24, 1
      %p416 = scmp.lt.s32.totalorder %s413, 7
      %s417 = scalar_select %p416, %s413, 7
      %s418 = smul.addr %s417, 4
      %s419 = smul.addr %s415, 32
      %s420 = sadd.s32 %s418, %s419
      %s421 = smul.addr %s420, 8
      %s422 = scalar_lea.vmem %s1, %s421
      %s423 = smul.u32 %s25, 4
      %s424 = ssub.s32 %s423, 1
      %p425 = scmp.gt.s32.totalorder %s424, 0
      %s426 = scalar_select %p425, %s424, 0
      %s427 = smul.u32 4, %s25
      %p428 = scmp.lt.s32.totalorder %s24, 1
      %s429 = scalar_select %p428, %s24, 1
      %p430 = scmp.lt.s32.totalorder %s427, 7
      %s431 = scalar_select %p430, %s427, 7
      %s432 = smul.addr %s429, 8
      %s433 = sadd.s32 %s431, %s432
      %s434 = smul.addr %s433, 8
      %s435 = scalar_lea.vmem %s9, %s434
      %s436 = smul.u32 4, %s25
      %v437 = vld [vmem:[%s2] sm:$0xf]
      %v438 = vld [vmem:[%s4] sm:$0xff]
      %v439 = vld [vmem:[%s6] sm:$0xff]
      %v440 = vld [vmem:[%s6 + $0x8] sm:$0xff]
      %v441 = vld [vmem:[%s6 + $0x10] sm:$0xff]
      %v442 = vld [vmem:[%s6 + $0x18] sm:$0xff]
      %v443 = vld [vmem:[%s6 + $0x20] sm:$0xf]
      %v444 = vld [vmem:[%s3] sm:$0x1]
      %v445 = vld [vmem:[%s5] sm:$0x1]
      %v446 = vld [vmem:[%s7] sm:$0x1]
      %v447 = vld [vmem:[%s8] sm:$0xff]
      %v448 = vld [vmem:[%s8 + $0x8] sm:$0xff]
      %v449 = vld [vmem:[%s8 + $0x10] sm:$0xff]
      %v450 = vld [vmem:[%s8 + $0x18] sm:$0xff]
      %v451 = vld [vmem:[%s408] sm:$0xff]
      %v452 = vld [vmem:[%s408 + $0x8] sm:$0xff]
      %v453 = vld [vmem:[%s408 + $0x10] sm:$0xff]
      %v454 = vld [vmem:[%s408 + $0x18] sm:$0xff]
      %v455 = vld [vmem:[%s408 + $0x20] sm:$0xff]
      %v456 = vld [vmem:[%s408 + $0x28] sm:$0xff]
      %v457 = vld [vmem:[%s408 + $0x30] sm:$0xff]
      %v458 = vld [vmem:[%s408 + $0x38] sm:$0xff]
      %v459 = vld [vmem:[%s408 + $0x40] sm:$0xff]
      %v460 = vld [vmem:[%s408 + $0x48] sm:$0xff]
      %v461 = vld [vmem:[%s408 + $0x50] sm:$0xff]
      %v462 = vld [vmem:[%s408 + $0x58] sm:$0xff]
      %v463 = vld [vmem:[%s408 + $0x60] sm:$0xff]
      %v464 = vld [vmem:[%s408 + $0x68] sm:$0xff]
      %v465 = vld [vmem:[%s408 + $0x70] sm:$0xff]
      %v466 = vld [vmem:[%s408 + $0x78] sm:$0xff]
      %v468 = vlaneseq
      %v469 = vshrl.u32 %v468, 7
      %v470 = vsub.s32 0, %v469
      %v471 = vrot.slane %v445, %v470
      %vm473 = vcmask 64512
      %v475 = vsel %vm473, %v451, 0
      %v478 = vsel %vm473, %v452, 0
      %v481 = vsel %vm473, %v453, 0
      %v484 = vsel %vm473, %v454, 0
      %v487 = vsel %vm473, %v455, 0
      %v490 = vsel %vm473, %v456, 0
      %v493 = vsel %vm473, %v457, 0
      %v496 = vsel %vm473, %v458, 0
      %v499 = vsel %vm473, %v459, 0
      %v502 = vsel %vm473, %v460, 0
      %v505 = vsel %vm473, %v461, 0
      %v508 = vsel %vm473, %v462, 0
      %v511 = vsel %vm473, %v463, 0
      %v514 = vsel %vm473, %v464, 0
      %v517 = vsel %vm473, %v465, 0
      %v520 = vsel %vm473, %v466, 0
      %522 = vmatprep.subr.mxu0 0.0
      %523 = vmatpush1.msra.mxu0 %v438
      %524 = vmatprep.subr.mxu0 0.0
      %525 = vmatpush1.msra.mxu0 0.0
      %526 = vmatprep.subr.mxu0 0.0
      %527 = vmatpush1.msra.mxu0 0.0
      %528 = vmatprep.subr.mxu0 0.0
      %529 = vmatpush1.msra.mxu0 0.0
      %530 = vmatprep.subr.mxu0 0.0
      %531 = vmatpush1.msra.mxu0 0.0
      %532 = vmatprep.subr.mxu0 0.0
      %533 = vmatpush1.msra.mxu0 0.0
      %534 = vmatprep.subr.mxu0 0.0
      %535 = vmatpush1.msra.mxu0 0.0
      %536 = vmatprep.subr.mxu0 0.0
      %537 = vmatpush1.msra.mxu0 0.0
      %538 = vmatprep.subr.mxu0 0.0
      %539 = vmatpush1.msra.mxu0 0.0
      %540 = vmatprep.subr.mxu0 0.0
      %541 = vmatpush1.msra.mxu0 0.0
      %542 = vmatprep.subr.mxu0 0.0
      %543 = vmatpush1.msra.mxu0 0.0
      %544 = vmatprep.subr.mxu0 0.0
      %545 = vmatpush1.msra.mxu0 0.0
      %546 = vmatprep.subr.mxu0 0.0
      %547 = vmatpush1.msra.mxu0 0.0
      %548 = vmatprep.subr.mxu0 0.0
      %549 = vmatpush1.msra.mxu0 0.0
      %550 = vmatprep.subr.mxu0 0.0
      %551 = vmatpush1.msra.mxu0 0.0
      %552 = vmatprep.subr.mxu0 0.0
      %553 = vmatpush1.msra.mxu0 0.0
      %554 = vmatprep.subr.mxu0 0.0
      %555 = vmatpush1.msra.mxu0 0.0
      %556 = vmatprep.subr.mxu0 0.0
      %557 = vmatpush1.msra.mxu0 0.0
      %558 = vmatprep.subr.mxu0 0.0
      %559 = vmatpush1.msra.mxu0 0.0
      %560 = vmatprep.subr.mxu0 0.0
      %561 = vmatpush1.msra.mxu0 0.0
      %562 = vmatprep.subr.mxu0 0.0
      %563 = vmatpush1.msra.mxu0 0.0
      %564 = vmatprep.subr.mxu0 0.0
      %565 = vmatpush1.msra.mxu0 0.0
      %566 = vmatprep.subr.mxu0 0.0
      %567 = vmatpush1.msra.mxu0 0.0
      %568 = vmatprep.subr.mxu0 0.0
      %569 = vmatpush1.msra.mxu0 0.0
      %570 = vmatprep.subr.mxu0 0.0
      %571 = vmatpush1.msra.mxu0 0.0
      %572 = vmatprep.subr.mxu0 0.0
      %573 = vmatpush1.msra.mxu0 0.0
      %574 = vmatprep.subr.mxu0 0.0
      %575 = vmatpush1.msra.mxu0 0.0
      %576 = vmatprep.subr.mxu0 0.0
      %577 = vmatpush1.msra.mxu0 0.0
      %578 = vmatprep.subr.mxu0 0.0
      %579 = vmatpush1.msra.mxu0 0.0
      %580 = vmatprep.subr.mxu0 0.0
      %581 = vmatpush1.msra.mxu0 0.0
      %582 = vmatprep.subr.mxu0 0.0
      %583 = vmatpush1.msra.mxu0 0.0
      %584 = vmatprep.subr.mxu0 0.0
      %585 = vmatpush1.msra.mxu0 0.0
      %586 = vmatprep.mubr.f32.mxu0 0.0
      %587 = vmatmul.mubr.f32.gmra.mrb[0].mxu0 %v475
      %v588 = vpop.f32.mrb[0].mxu0
      %v589 = vadd.f32 %v471, %v588
      %v590 = vpop.f32.mrb[0].mxu0
      %591 = vmatprep.mubr.f32.mxu0 0.0
      %592 = vmatmul.mubr.f32.gmra.mrb[0].mxu0 %v478
      %v593 = vpop.f32.mrb[0].mxu0
      %v594 = vadd.f32 %v471, %v593
      %v595 = vpop.f32.mrb[0].mxu0
      %596 = vmatprep.mubr.f32.mxu0 0.0
      %597 = vmatmul.mubr.f32.gmra.mrb[0].mxu0 %v481
      %v598 = vpop.f32.mrb[0].mxu0
      %v599 = vadd.f32 %v471, %v598
      %v600 = vpop.f32.mrb[0].mxu0
      %601 = vmatprep.mubr.f32.mxu0 0.0
      %602 = vmatmul.mubr.f32.gmra.mrb[0].mxu0 %v484
      %v603 = vpop.f32.mrb[0].mxu0
      %v604 = vadd.f32 %v471, %v603
      %v605 = vpop.f32.mrb[0].mxu0
      %606 = vmatprep.mubr.f32.mxu0 0.0
      %607 = vmatmul.mubr.f32.gmra.mrb[0].mxu0 %v487
      %v608 = vpop.f32.mrb[0].mxu0
      %v609 = vadd.f32 %v471, %v608
      %v610 = vpop.f32.mrb[0].mxu0
      %611 = vmatprep.mubr.f32.mxu0 0.0
      %612 = vmatmul.mubr.f32.gmra.mrb[0].mxu0 %v490
      %v613 = vpop.f32.mrb[0].mxu0
      %v614 = vadd.f32 %v471, %v613
      %v615 = vpop.f32.mrb[0].mxu0
      %616 = vmatprep.mubr.f32.mxu0 0.0
      %617 = vmatmul.mubr.f32.gmra.mrb[0].mxu0 %v493
      %v618 = vpop.f32.mrb[0].mxu0
      %v619 = vadd.f32 %v471, %v618
      %v620 = vpop.f32.mrb[0].mxu0
      %621 = vmatprep.mubr.f32.mxu0 0.0
      %622 = vmatmul.mubr.f32.gmra.mrb[0].mxu0 %v496
      %v623 = vpop.f32.mrb[0].mxu0
      %v624 = vadd.f32 %v471, %v623
      %v625 = vpop.f32.mrb[0].mxu0
      %626 = vmatprep.mubr.f32.mxu0 0.0
      %627 = vmatmul.mubr.f32.gmra.mrb[0].mxu0 %v499
      %v628 = vpop.f32.mrb[0].mxu0
      %v629 = vadd.f32 %v471, %v628
      %v630 = vpop.f32.mrb[0].mxu0
      %631 = vmatprep.mubr.f32.mxu0 0.0
      %632 = vmatmul.mubr.f32.gmra.mrb[0].mxu0 %v502
      %v633 = vpop.f32.mrb[0].mxu0
      %v634 = vadd.f32 %v471, %v633
      %v635 = vpop.f32.mrb[0].mxu0
      %636 = vmatprep.mubr.f32.mxu0 0.0
      %637 = vmatmul.mubr.f32.gmra.mrb[0].mxu0 %v505
      %v638 = vpop.f32.mrb[0].mxu0
      %v639 = vadd.f32 %v471, %v638
      %v640 = vpop.f32.mrb[0].mxu0
      %641 = vmatprep.mubr.f32.mxu0 0.0
      %642 = vmatmul.mubr.f32.gmra.mrb[0].mxu0 %v508
      %v643 = vpop.f32.mrb[0].mxu0
      %v644 = vadd.f32 %v471, %v643
      %v645 = vpop.f32.mrb[0].mxu0
      %646 = vmatprep.mubr.f32.mxu0 0.0
      %647 = vmatmul.mubr.f32.gmra.mrb[0].mxu0 %v511
      %v648 = vpop.f32.mrb[0].mxu0
      %v649 = vadd.f32 %v471, %v648
      %v650 = vpop.f32.mrb[0].mxu0
      %651 = vmatprep.mubr.f32.mxu0 0.0
      %652 = vmatmul.mubr.f32.gmra.mrb[0].mxu0 %v514
      %v653 = vpop.f32.mrb[0].mxu0
      %v654 = vadd.f32 %v471, %v653
      %v655 = vpop.f32.mrb[0].mxu0
      %656 = vmatprep.mubr.f32.mxu0 0.0
      %657 = vmatmul.mubr.f32.gmra.mrb[0].mxu0 %v517
      %v658 = vpop.f32.mrb[0].mxu0
      %v659 = vadd.f32 %v471, %v658
      %v660 = vpop.f32.mrb[0].mxu0
      %661 = vmatprep.mubr.f32.mxu0 0.0
      %662 = vmatmul.mubr.f32.gmra.mrb[0].mxu0 %v520
      %v663 = vpop.f32.mrb[0].mxu0
      %v664 = vadd.f32 %v471, %v663
      %v665 = vpop.f32.mrb[0].mxu0
      %666 = vdwg.mxu0
      %v667 = vxor.u32 %v589, 2147483648
      %v668 = vxor.u32 %v594, 2147483648
      %v669 = vxor.u32 %v599, 2147483648
      %v670 = vxor.u32 %v604, 2147483648
      %v671 = vxor.u32 %v609, 2147483648
      %v672 = vxor.u32 %v614, 2147483648
      %v673 = vxor.u32 %v619, 2147483648
      %v674 = vxor.u32 %v624, 2147483648
      %v675 = vxor.u32 %v629, 2147483648
      %v676 = vxor.u32 %v634, 2147483648
      %v677 = vxor.u32 %v639, 2147483648
      %v678 = vxor.u32 %v644, 2147483648
      %v679 = vxor.u32 %v649, 2147483648
      %v680 = vxor.u32 %v654, 2147483648
      %v681 = vxor.u32 %v659, 2147483648
      %v682 = vxor.u32 %v664, 2147483648
      %v683 = vmul.f32 %v667, 1.442695
      %v684 = vpow.pop %v683
      %v685 = vmul.f32 %v668, 1.442695
      %v686 = vpow.pop %v685
      %v687 = vmul.f32 %v669, 1.442695
      %v688 = vpow.pop %v687
      %v689 = vmul.f32 %v670, 1.442695
      %v690 = vpow.pop %v689
      %v691 = vmul.f32 %v671, 1.442695
      %v692 = vpow.pop %v691
      %v693 = vmul.f32 %v672, 1.442695
      %v694 = vpow.pop %v693
      %v695 = vmul.f32 %v673, 1.442695
      %v696 = vpow.pop %v695
      %v697 = vmul.f32 %v674, 1.442695
      %v698 = vpow.pop %v697
      %v699 = vmul.f32 %v675, 1.442695
      %v700 = vpow.pop %v699
      %v701 = vmul.f32 %v676, 1.442695
      %v702 = vpow.pop %v701
      %v703 = vmul.f32 %v677, 1.442695
      %v704 = vpow.pop %v703
      %v705 = vmul.f32 %v678, 1.442695
      %v706 = vpow.pop %v705
      %v707 = vmul.f32 %v679, 1.442695
      %v708 = vpow.pop %v707
      %v709 = vmul.f32 %v680, 1.442695
      %v710 = vpow.pop %v709
      %v711 = vmul.f32 %v681, 1.442695
      %v712 = vpow.pop %v711
      %v713 = vmul.f32 %v682, 1.442695
      %v714 = vpow.pop %v713
      %v715 = vadd.f32 %v684, 1.0
      %v716 = vadd.f32 %v686, 1.0
      %v717 = vadd.f32 %v688, 1.0
      %v718 = vadd.f32 %v690, 1.0
      %v719 = vadd.f32 %v692, 1.0
      %v720 = vadd.f32 %v694, 1.0
      %v721 = vadd.f32 %v696, 1.0
      %v722 = vadd.f32 %v698, 1.0
      %v723 = vadd.f32 %v700, 1.0
      %v724 = vadd.f32 %v702, 1.0
      %v725 = vadd.f32 %v704, 1.0
      %v726 = vadd.f32 %v706, 1.0
      %v727 = vadd.f32 %v708, 1.0
      %v728 = vadd.f32 %v710, 1.0
      %v729 = vadd.f32 %v712, 1.0
      %v730 = vadd.f32 %v714, 1.0
      %v731 = vrcp.pop %v715
      %v732 = vmul.f32 1.0, %v731
      %v733 = vrcp.pop %v716
      %v734 = vmul.f32 1.0, %v733
      %v735 = vrcp.pop %v717
      %v736 = vmul.f32 1.0, %v735
      %v737 = vrcp.pop %v718
      %v738 = vmul.f32 1.0, %v737
      %v739 = vrcp.pop %v719
      %v740 = vmul.f32 1.0, %v739
      %v741 = vrcp.pop %v720
      %v742 = vmul.f32 1.0, %v741
      %v743 = vrcp.pop %v721
      %v744 = vmul.f32 1.0, %v743
      %v745 = vrcp.pop %v722
      %v746 = vmul.f32 1.0, %v745
      %v747 = vrcp.pop %v723
      %v748 = vmul.f32 1.0, %v747
      %v749 = vrcp.pop %v724
      %v750 = vmul.f32 1.0, %v749
      %v751 = vrcp.pop %v725
      %v752 = vmul.f32 1.0, %v751
      %v753 = vrcp.pop %v726
      %v754 = vmul.f32 1.0, %v753
      %v755 = vrcp.pop %v727
      %v756 = vmul.f32 1.0, %v755
      %v757 = vrcp.pop %v728
      %v758 = vmul.f32 1.0, %v757
      %v759 = vrcp.pop %v729
      %v760 = vmul.f32 1.0, %v759
      %v761 = vrcp.pop %v730
      %v762 = vmul.f32 1.0, %v761
      %v763 = vmul.f32 %v589, %v732
      %v764 = vmul.f32 %v594, %v734
      %v765 = vmul.f32 %v599, %v736
      %v766 = vmul.f32 %v604, %v738
      %v767 = vmul.f32 %v609, %v740
      %v768 = vmul.f32 %v614, %v742
      %v769 = vmul.f32 %v619, %v744
      %v770 = vmul.f32 %v624, %v746
      %v771 = vmul.f32 %v629, %v748
      %v772 = vmul.f32 %v634, %v750
      %v773 = vmul.f32 %v639, %v752
      %v774 = vmul.f32 %v644, %v754
      %v775 = vmul.f32 %v649, %v756
      %v776 = vmul.f32 %v654, %v758
      %v777 = vmul.f32 %v659, %v760
      %v778 = vmul.f32 %v664, %v762
      %v779 = vmul.f32 %v763, %v447
      %v780 = vmul.f32 %v764, %v448
      %v781 = vmul.f32 %v765, %v449
      %v782 = vmul.f32 %v766, %v450
      %v783 = vmul.f32 %v767, %v447
      %v784 = vmul.f32 %v768, %v448
      %v785 = vmul.f32 %v769, %v449
      %v786 = vmul.f32 %v770, %v450
      %v787 = vmul.f32 %v771, %v447
      %v788 = vmul.f32 %v772, %v448
      %v789 = vmul.f32 %v773, %v449
      %v790 = vmul.f32 %v774, %v450
      %v791 = vmul.f32 %v775, %v447
      %v792 = vmul.f32 %v776, %v448
      %v793 = vmul.f32 %v777, %v449
      %v794 = vmul.f32 %v778, %v450
      %s795 = scalar_lea.vmem [#allocation2], 32
      %796 = vst.msk [vmem:[%s795] sm:$0xff] %vm473, %v779
      %797 = vst.msk [vmem:[%s795 + $0x8] sm:$0xff] %vm473, %v780
      %798 = vst.msk [vmem:[%s795 + $0x10] sm:$0xff] %vm473, %v781
      %799 = vst.msk [vmem:[%s795 + $0x18] sm:$0xff] %vm473, %v782
      %800 = vst.msk [vmem:[%s795 + $0x20] sm:$0xff] %vm473, %v783
      %801 = vst.msk [vmem:[%s795 + $0x28] sm:$0xff] %vm473, %v784
      %802 = vst.msk [vmem:[%s795 + $0x30] sm:$0xff] %vm473, %v785
      %803 = vst.msk [vmem:[%s795 + $0x38] sm:$0xff] %vm473, %v786
      %804 = vst.msk [vmem:[%s795 + $0x40] sm:$0xff] %vm473, %v787
      %805 = vst.msk [vmem:[%s795 + $0x48] sm:$0xff] %vm473, %v788
      %806 = vst.msk [vmem:[%s795 + $0x50] sm:$0xff] %vm473, %v789
      %807 = vst.msk [vmem:[%s795 + $0x58] sm:$0xff] %vm473, %v790
      %808 = vst.msk [vmem:[%s795 + $0x60] sm:$0xff] %vm473, %v791
      %809 = vst.msk [vmem:[%s795 + $0x68] sm:$0xff] %vm473, %v792
      %810 = vst.msk [vmem:[%s795 + $0x70] sm:$0xff] %vm473, %v793
      %811 = vst.msk [vmem:[%s795 + $0x78] sm:$0xff] %vm473, %v794
      %p812 = scmp.eq.s32.totalorder %s25, 0
      // Predicated region
      $region57: #{mp_forward.1} parent=55 // pred_check
        %p813 = pneg %p812
      $region58: #{mp_forward.1} parent=55 // pred_check_branch
        %815 = sbr.rel (%p813) target = $region60
      $region59: #{mp_forward.1} parent=55 // pred_region
        %816 = vst.msk [vmem:[#allocation2] sm:$0xff] %vm473, 0.0
        %817 = vst.msk [vmem:[#allocation2 + $0x8] sm:$0xff] %vm473, 0.0
        %818 = vst.msk [vmem:[#allocation2 + $0x10] sm:$0xff] %vm473, 0.0
        %819 = vst.msk [vmem:[#allocation2 + $0x18] sm:$0xff] %vm473, 0.0
      $region60: #{mp_forward.1} parent=55 // pred_fallthru
        _
      %p820 = scmp.gt.s32.totalorder %s25, 0
      // Predicated region
      $region61: #{mp_forward.1} parent=55 // pred_check
        %p821 = pneg %p820
      $region62: #{mp_forward.1} parent=55 // pred_check_branch
        %823 = sbr.rel (%p821) target = $region64
      $region63: #{mp_forward.1} parent=55 // pred_region
        %v824 = vld [vmem:[%s422] sm:$0xff]
        %v825 = vld [vmem:[%s422 + $0x8] sm:$0xff]
        %v826 = vld [vmem:[%s422 + $0x10] sm:$0xff]
        %v827 = vld [vmem:[%s422 + $0x18] sm:$0xff]
        %v829 = vsel %vm473, %v824, 0
        %v832 = vsel %vm473, %v825, 0
        %v835 = vsel %vm473, %v826, 0
        %v838 = vsel %vm473, %v827, 0
        %840 = vmatprep.subr.mxu0 0.0
        %841 = vmatpush1.msra.mxu0 %v438
        %842 = vmatprep.subr.mxu0 0.0
        %843 = vmatpush1.msra.mxu0 0.0
        %844 = vmatprep.subr.mxu0 0.0
        %845 = vmatpush1.msra.mxu0 0.0
        %846 = vmatprep.subr.mxu0 0.0
        %847 = vmatpush1.msra.mxu0 0.0
        %848 = vmatprep.subr.mxu0 0.0
        %849 = vmatpush1.msra.mxu0 0.0
        %850 = vmatprep.subr.mxu0 0.0
        %851 = vmatpush1.msra.mxu0 0.0
        %852 = vmatprep.subr.mxu0 0.0
        %853 = vmatpush1.msra.mxu0 0.0
        %854 = vmatprep.subr.mxu0 0.0
        %855 = vmatpush1.msra.mxu0 0.0
        %856 = vmatprep.subr.mxu0 0.0
        %857 = vmatpush1.msra.mxu0 0.0
        %858 = vmatprep.subr.mxu0 0.0
        %859 = vmatpush1.msra.mxu0 0.0
        %860 = vmatprep.subr.mxu0 0.0
        %861 = vmatpush1.msra.mxu0 0.0
        %862 = vmatprep.subr.mxu0 0.0
        %863 = vmatpush1.msra.mxu0 0.0
        %864 = vmatprep.subr.mxu0 0.0
        %865 = vmatpush1.msra.mxu0 0.0
        %866 = vmatprep.subr.mxu0 0.0
        %867 = vmatpush1.msra.mxu0 0.0
        %868 = vmatprep.subr.mxu0 0.0
        %869 = vmatpush1.msra.mxu0 0.0
        %870 = vmatprep.subr.mxu0 0.0
        %871 = vmatpush1.msra.mxu0 0.0
        %872 = vmatprep.subr.mxu0 0.0
        %873 = vmatpush1.msra.mxu0 0.0
        %874 = vmatprep.subr.mxu0 0.0
        %875 = vmatpush1.msra.mxu0 0.0
        %876 = vmatprep.subr.mxu0 0.0
        %877 = vmatpush1.msra.mxu0 0.0
        %878 = vmatprep.subr.mxu0 0.0
        %879 = vmatpush1.msra.mxu0 0.0
        %880 = vmatprep.subr.mxu0 0.0
        %881 = vmatpush1.msra.mxu0 0.0
        %882 = vmatprep.subr.mxu0 0.0
        %883 = vmatpush1.msra.mxu0 0.0
        %884 = vmatprep.subr.mxu0 0.0
        %885 = vmatpush1.msra.mxu0 0.0
        %886 = vmatprep.subr.mxu0 0.0
        %887 = vmatpush1.msra.mxu0 0.0
        %888 = vmatprep.subr.mxu0 0.0
        %889 = vmatpush1.msra.mxu0 0.0
        %890 = vmatprep.subr.mxu0 0.0
        %891 = vmatpush1.msra.mxu0 0.0
        %892 = vmatprep.subr.mxu0 0.0
        %893 = vmatpush1.msra.mxu0 0.0
        %894 = vmatprep.subr.mxu0 0.0
        %895 = vmatpush1.msra.mxu0 0.0
        %896 = vmatprep.subr.mxu0 0.0
        %897 = vmatpush1.msra.mxu0 0.0
        %898 = vmatprep.subr.mxu0 0.0
        %899 = vmatpush1.msra.mxu0 0.0
        %900 = vmatprep.subr.mxu0 0.0
        %901 = vmatpush1.msra.mxu0 0.0
        %902 = vmatprep.subr.mxu0 0.0
        %903 = vmatpush1.msra.mxu0 0.0
        %904 = vmatprep.mubr.f32.mxu0 0.0
        %905 = vmatmul.mubr.f32.gmra.mrb[0].mxu0 %v829
        %v906 = vpop.f32.mrb[0].mxu0
        %v907 = vadd.f32 %v471, %v906
        %v908 = vpop.f32.mrb[0].mxu0
        %909 = vmatprep.mubr.f32.mxu0 0.0
        %910 = vmatmul.mubr.f32.gmra.mrb[0].mxu0 %v832
        %v911 = vpop.f32.mrb[0].mxu0
        %v912 = vadd.f32 %v471, %v911
        %v913 = vpop.f32.mrb[0].mxu0
        %914 = vmatprep.mubr.f32.mxu0 0.0
        %915 = vmatmul.mubr.f32.gmra.mrb[0].mxu0 %v835
        %v916 = vpop.f32.mrb[0].mxu0
        %v917 = vadd.f32 %v471, %v916
        %v918 = vpop.f32.mrb[0].mxu0
        %919 = vmatprep.mubr.f32.mxu0 0.0
        %920 = vmatmul.mubr.f32.gmra.mrb[0].mxu0 %v838
        %v921 = vpop.f32.mrb[0].mxu0
        %v922 = vadd.f32 %v471, %v921
        %v923 = vpop.f32.mrb[0].mxu0
        %924 = vdwg.mxu0
        %v925 = vxor.u32 %v907, 2147483648
        %v926 = vxor.u32 %v912, 2147483648
        %v927 = vxor.u32 %v917, 2147483648
        %v928 = vxor.u32 %v922, 2147483648
        %v929 = vmul.f32 %v925, 1.442695
        %v930 = vpow.pop %v929
        %v931 = vmul.f32 %v926, 1.442695
        %v932 = vpow.pop %v931
        %v933 = vmul.f32 %v927, 1.442695
        %v934 = vpow.pop %v933
        %v935 = vmul.f32 %v928, 1.442695
        %v936 = vpow.pop %v935
        %v937 = vadd.f32 %v930, 1.0
        %v938 = vadd.f32 %v932, 1.0
        %v939 = vadd.f32 %v934, 1.0
        %v940 = vadd.f32 %v936, 1.0
        %v941 = vrcp.pop %v937
        %v942 = vmul.f32 1.0, %v941
        %v943 = vrcp.pop %v938
        %v944 = vmul.f32 1.0, %v943
        %v945 = vrcp.pop %v939
        %v946 = vmul.f32 1.0, %v945
        %v947 = vrcp.pop %v940
        %v948 = vmul.f32 1.0, %v947
        %v949 = vmul.f32 %v907, %v942
        %v950 = vmul.f32 %v912, %v944
        %v951 = vmul.f32 %v917, %v946
        %v952 = vmul.f32 %v922, %v948
        %v953 = vmul.f32 %v949, %v447
        %v954 = vmul.f32 %v950, %v448
        %v955 = vmul.f32 %v951, %v449
        %v956 = vmul.f32 %v952, %v450
        %957 = vst.msk [vmem:[#allocation2] sm:$0xff] %vm473, %v953
        %958 = vst.msk [vmem:[#allocation2 + $0x8] sm:$0xff] %vm473, %v954
        %959 = vst.msk [vmem:[#allocation2 + $0x10] sm:$0xff] %vm473, %v955
        %960 = vst.msk [vmem:[#allocation2 + $0x18] sm:$0xff] %vm473, %v956
      $region64: #{mp_forward.1} parent=55 // pred_fallthru
        _
      %961 = vrot.lane.b32.xlu0 %v451, 124
      %v962 = vpop.permute.xlu0 %961
      %963 = vrot.lane.b32.xlu0 %v452, 124
      %v964 = vpop.permute.xlu0 %963
      %965 = vrot.lane.b32.xlu0 %v455, 124
      %v966 = vpop.permute.xlu0 %965
      %967 = vrot.lane.b32.xlu0 %v456, 124
      %v968 = vpop.permute.xlu0 %967
      %969 = vrot.lane.b32.xlu0 %v459, 124
      %v970 = vpop.permute.xlu0 %969
      %971 = vrot.lane.b32.xlu0 %v460, 124
      %v972 = vpop.permute.xlu0 %971
      %973 = vrot.lane.b32.xlu0 %v463, 124
      %v974 = vpop.permute.xlu0 %973
      %975 = vrot.lane.b32.xlu0 %v464, 124
      %v976 = vpop.permute.xlu0 %975
      %v985 = vmax.f32 %v451, %v962
      %v986 = vmax.f32 %v452, %v964
      %v987 = vmax.f32 %v455, %v966
      %v988 = vmax.f32 %v456, %v968
      %v989 = vmax.f32 %v459, %v970
      %v990 = vmax.f32 %v460, %v972
      %v991 = vmax.f32 %v463, %v974
      %v992 = vmax.f32 %v464, %v976
      %993 = vrot.lane.b32.xlu0 %v453, 124
      %v994 = vpop.permute.xlu0 %993
      %995 = vrot.lane.b32.xlu0 %v454, 124
      %v996 = vpop.permute.xlu0 %995
      %997 = vrot.lane.b32.xlu0 %v457, 124
      %v998 = vpop.permute.xlu0 %997
      %999 = vrot.lane.b32.xlu0 %v458, 124
      %v1000 = vpop.permute.xlu0 %999
      %1001 = vrot.lane.b32.xlu0 %v461, 124
      %v1002 = vpop.permute.xlu0 %1001
      %1003 = vrot.lane.b32.xlu0 %v462, 124
      %v1004 = vpop.permute.xlu0 %1003
      %1005 = vrot.lane.b32.xlu0 %v465, 124
      %v1006 = vpop.permute.xlu0 %1005
      %1007 = vrot.lane.b32.xlu0 %v466, 124
      %v1008 = vpop.permute.xlu0 %1007
      %v1017 = vmax.f32 %v453, %v994
      %v1018 = vmax.f32 %v454, %v996
      %v1019 = vmax.f32 %v457, %v998
      %v1020 = vmax.f32 %v458, %v1000
      %v1021 = vmax.f32 %v461, %v1002
      %v1022 = vmax.f32 %v462, %v1004
      %v1023 = vmax.f32 %v465, %v1006
      %v1024 = vmax.f32 %v466, %v1008
      %v1025 = vmax.f32 %v985, %v1017
      %v1026 = vmax.f32 %v986, %v1018
      %v1027 = vmax.f32 %v987, %v1019
      %v1028 = vmax.f32 %v988, %v1020
      %v1029 = vmax.f32 %v989, %v1021
      %v1030 = vmax.f32 %v990, %v1022
      %v1031 = vmax.f32 %v991, %v1023
      %v1032 = vmax.f32 %v992, %v1024
      %vm1041 = vcmask 1046528
      %v1042 = vrot.slane %v1025, 1
      %v1043 = vrot.slane %v1026, 1
      %v1044 = vsel %vm1041, %v1042, %v1043
      %v1045 = vrot.slane %v1027, 1
      %v1046 = vrot.slane %v1028, 1
      %v1047 = vsel %vm1041, %v1045, %v1046
      %v1048 = vrot.slane %v1029, 1
      %v1049 = vrot.slane %v1030, 1
      %v1050 = vsel %vm1041, %v1048, %v1049
      %v1051 = vrot.slane %v1031, 1
      %v1052 = vrot.slane %v1032, 1
      %v1053 = vsel %vm1041, %v1051, %v1052
      %v1055 = vlaneseq
      %v1056 = vshrl.u32 %v1055, 7
      %v1057 = vsub.s32 0, %v1056
      %v1058 = vrot.slane %v444, %v1057
      %vm1060 = vcmask 31744
      %v1061 = vsel %vm1060, %v1044, 0
      %v1063 = vsel %vm1060, %v1047, 0
      %v1065 = vsel %vm1060, %v1050, 0
      %v1067 = vsel %vm1060, %v1053, 0
      %vm1069 = vcmask 1043456
      %v1071 = vsel %vm1069, %v437, 0
      %1073 = vmatprep.subr.mxu0 0.0
      %1074 = vmatpush1.msra.mxu0 %v1071
      %1075 = vmatprep.subr.mxu0 0.0
      %1076 = vmatpush1.msra.mxu0 0.0
      %1077 = vmatprep.subr.mxu0 0.0
      %1078 = vmatpush1.msra.mxu0 0.0
      %1079 = vmatprep.subr.mxu0 0.0
      %1080 = vmatpush1.msra.mxu0 0.0
      %1081 = vmatprep.subr.mxu0 0.0
      %1082 = vmatpush1.msra.mxu0 0.0
      %1083 = vmatprep.subr.mxu0 0.0
      %1084 = vmatpush1.msra.mxu0 0.0
      %1085 = vmatprep.subr.mxu0 0.0
      %1086 = vmatpush1.msra.mxu0 0.0
      %1087 = vmatprep.subr.mxu0 0.0
      %1088 = vmatpush1.msra.mxu0 0.0
      %1089 = vmatprep.subr.mxu0 0.0
      %1090 = vmatpush1.msra.mxu0 0.0
      %1091 = vmatprep.subr.mxu0 0.0
      %1092 = vmatpush1.msra.mxu0 0.0
      %1093 = vmatprep.subr.mxu0 0.0
      %1094 = vmatpush1.msra.mxu0 0.0
      %1095 = vmatprep.subr.mxu0 0.0
      %1096 = vmatpush1.msra.mxu0 0.0
      %1097 = vmatprep.subr.mxu0 0.0
      %1098 = vmatpush1.msra.mxu0 0.0
      %1099 = vmatprep.subr.mxu0 0.0
      %1100 = vmatpush1.msra.mxu0 0.0
      %1101 = vmatprep.subr.mxu0 0.0
      %1102 = vmatpush1.msra.mxu0 0.0
      %1103 = vmatprep.subr.mxu0 0.0
      %1104 = vmatpush1.msra.mxu0 0.0
      %1105 = vmatprep.subr.mxu0 0.0
      %1106 = vmatpush1.msra.mxu0 0.0
      %1107 = vmatprep.subr.mxu0 0.0
      %1108 = vmatpush1.msra.mxu0 0.0
      %1109 = vmatprep.subr.mxu0 0.0
      %1110 = vmatpush1.msra.mxu0 0.0
      %1111 = vmatprep.subr.mxu0 0.0
      %1112 = vmatpush1.msra.mxu0 0.0
      %1113 = vmatprep.subr.mxu0 0.0
      %1114 = vmatpush1.msra.mxu0 0.0
      %1115 = vmatprep.subr.mxu0 0.0
      %1116 = vmatpush1.msra.mxu0 0.0
      %1117 = vmatprep.subr.mxu0 0.0
      %1118 = vmatpush1.msra.mxu0 0.0
      %1119 = vmatprep.subr.mxu0 0.0
      %1120 = vmatpush1.msra.mxu0 0.0
      %1121 = vmatprep.subr.mxu0 0.0
      %1122 = vmatpush1.msra.mxu0 0.0
      %1123 = vmatprep.subr.mxu0 0.0
      %1124 = vmatpush1.msra.mxu0 0.0
      %1125 = vmatprep.subr.mxu0 0.0
      %1126 = vmatpush1.msra.mxu0 0.0
      %1127 = vmatprep.subr.mxu0 0.0
      %1128 = vmatpush1.msra.mxu0 0.0
      %1129 = vmatprep.subr.mxu0 0.0
      %1130 = vmatpush1.msra.mxu0 0.0
      %1131 = vmatprep.subr.mxu0 0.0
      %1132 = vmatpush1.msra.mxu0 0.0
      %1133 = vmatprep.subr.mxu0 0.0
      %1134 = vmatpush1.msra.mxu0 0.0
      %1135 = vmatprep.subr.mxu0 0.0
      %1136 = vmatpush1.msra.mxu0 0.0
      %1137 = vmatprep.mubr.f32.mxu0 0.0
      %1138 = vmatmul.mubr.f32.gmra.mrb[0].mxu0 %v1061
      %v1139 = vpop.f32.mrb[0].mxu0
      %v1140 = vadd.f32 %v1058, %v1139
      %v1141 = vpop.f32.mrb[0].mxu0
      %1142 = vmatprep.mubr.f32.mxu0 0.0
      %1143 = vmatmul.mubr.f32.gmra.mrb[0].mxu0 %v1063
      %v1144 = vpop.f32.mrb[0].mxu0
      %v1145 = vadd.f32 %v1058, %v1144
      %v1146 = vpop.f32.mrb[0].mxu0
      %1147 = vmatprep.mubr.f32.mxu0 0.0
      %1148 = vmatmul.mubr.f32.gmra.mrb[0].mxu0 %v1065
      %v1149 = vpop.f32.mrb[0].mxu0
      %v1150 = vadd.f32 %v1058, %v1149
      %v1151 = vpop.f32.mrb[0].mxu0
      %1152 = vmatprep.mubr.f32.mxu0 0.0
      %1153 = vmatmul.mubr.f32.gmra.mrb[0].mxu0 %v1067
      %v1154 = vpop.f32.mrb[0].mxu0
      %v1155 = vadd.f32 %v1058, %v1154
      %v1156 = vpop.f32.mrb[0].mxu0
      %1157 = vdwg.mxu0
      %v1158 = vxor.u32 %v1140, 2147483648
      %v1159 = vxor.u32 %v1145, 2147483648
      %v1160 = vxor.u32 %v1150, 2147483648
      %v1161 = vxor.u32 %v1155, 2147483648
      %v1162 = vmul.f32 %v1158, 1.442695
      %v1163 = vpow.pop %v1162
      %v1164 = vmul.f32 %v1159, 1.442695
      %v1165 = vpow.pop %v1164
      %v1166 = vmul.f32 %v1160, 1.442695
      %v1167 = vpow.pop %v1166
      %v1168 = vmul.f32 %v1161, 1.442695
      %v1169 = vpow.pop %v1168
      %v1170 = vadd.f32 %v1163, 1.0
      %v1171 = vadd.f32 %v1165, 1.0
      %v1172 = vadd.f32 %v1167, 1.0
      %v1173 = vadd.f32 %v1169, 1.0
      %v1174 = vrcp.pop %v1170
      %v1175 = vmul.f32 1.0, %v1174
      %v1176 = vrcp.pop %v1171
      %v1177 = vmul.f32 1.0, %v1176
      %v1178 = vrcp.pop %v1172
      %v1179 = vmul.f32 1.0, %v1178
      %v1180 = vrcp.pop %v1173
      %v1181 = vmul.f32 1.0, %v1180
      %v1182 = vmul.f32 %v1140, %v1175
      %v1183 = vmul.f32 %v1145, %v1177
      %v1184 = vmul.f32 %v1150, %v1179
      %v1185 = vmul.f32 %v1155, %v1181
      %v1186 = vld [vmem:[#allocation2 + $0x10] sm:$0xff]
      %v1187 = vld [vmem:[#allocation2 + $0x30] sm:$0xff]
      %v1188 = vld [vmem:[#allocation2 + $0x50] sm:$0xff]
      %v1189 = vld [vmem:[#allocation2 + $0x70] sm:$0xff]
      %v1190 = vld [vmem:[#allocation2 + $0x11] sm:$0xff]
      %v1191 = vld [vmem:[#allocation2 + $0x31] sm:$0xff]
      %v1192 = vld [vmem:[#allocation2 + $0x51] sm:$0xff]
      %v1193 = vld [vmem:[#allocation2 + $0x71] sm:$0xff]
      %v1194 = vld [vmem:[%s795] sm:$0xff]
      %v1195 = vld [vmem:[%s795 + $0x20] sm:$0xff]
      %v1196 = vld [vmem:[%s795 + $0x40] sm:$0xff]
      %v1197 = vld [vmem:[%s795 + $0x60] sm:$0xff]
      %v1198 = vld [vmem:[%s795 + $0x1] sm:$0xff]
      %v1199 = vld [vmem:[%s795 + $0x21] sm:$0xff]
      %v1200 = vld [vmem:[%s795 + $0x41] sm:$0xff]
      %v1201 = vld [vmem:[%s795 + $0x61] sm:$0xff]
      %v1202 = vld [vmem:[%s795 + $0x10] sm:$0xff]
      %v1203 = vld [vmem:[%s795 + $0x30] sm:$0xff]
      %v1204 = vld [vmem:[%s795 + $0x50] sm:$0xff]
      %v1205 = vld [vmem:[%s795 + $0x70] sm:$0xff]
      %v1206 = vld [vmem:[%s795 + $0x11] sm:$0xff]
      %v1207 = vld [vmem:[%s795 + $0x31] sm:$0xff]
      %v1208 = vld [vmem:[%s795 + $0x51] sm:$0xff]
      %v1209 = vld [vmem:[%s795 + $0x71] sm:$0xff]
      %1214 = vrot.lane.b32.xlu0 %v1186, 124
      %v1215 = vpop.permute.xlu0 %1214
      %1216 = vrot.lane.b32.xlu0 %v1187, 124
      %v1217 = vpop.permute.xlu0 %1216
      %1218 = vrot.lane.b32.xlu0 %v1188, 124
      %v1219 = vpop.permute.xlu0 %1218
      %1220 = vrot.lane.b32.xlu0 %v1189, 124
      %v1221 = vpop.permute.xlu0 %1220
      %1230 = vrot.lane.b32.xlu0 %v1190, 4
      %v1231 = vpop.permute.xlu0 %1230
      %1232 = vrot.lane.b32.xlu0 %v1191, 4
      %v1233 = vpop.permute.xlu0 %1232
      %1234 = vrot.lane.b32.xlu0 %v1192, 4
      %v1235 = vpop.permute.xlu0 %1234
      %1236 = vrot.lane.b32.xlu0 %v1193, 4
      %v1237 = vpop.permute.xlu0 %1236
      %1246 = vrot.lane.b32.xlu0 %v1194, 8
      %v1247 = vpop.permute.xlu0 %1246
      %1248 = vrot.lane.b32.xlu0 %v1195, 8
      %v1249 = vpop.permute.xlu0 %1248
      %1250 = vrot.lane.b32.xlu0 %v1196, 8
      %v1251 = vpop.permute.xlu0 %1250
      %1252 = vrot.lane.b32.xlu0 %v1197, 8
      %v1253 = vpop.permute.xlu0 %1252
      %1262 = vrot.lane.b32.xlu0 %v1198, 16
      %v1263 = vpop.permute.xlu0 %1262
      %1264 = vrot.lane.b32.xlu0 %v1199, 16
      %v1265 = vpop.permute.xlu0 %1264
      %1266 = vrot.lane.b32.xlu0 %v1200, 16
      %v1267 = vpop.permute.xlu0 %1266
      %1268 = vrot.lane.b32.xlu0 %v1201, 16
      %v1269 = vpop.permute.xlu0 %1268
      %1278 = vrot.lane.b32.xlu0 %v1202, 20
      %v1279 = vpop.permute.xlu0 %1278
      %1280 = vrot.lane.b32.xlu0 %v1203, 20
      %v1281 = vpop.permute.xlu0 %1280
      %1282 = vrot.lane.b32.xlu0 %v1204, 20
      %v1283 = vpop.permute.xlu0 %1282
      %1284 = vrot.lane.b32.xlu0 %v1205, 20
      %v1285 = vpop.permute.xlu0 %1284
      %1294 = vrot.lane.b32.xlu0 %v1206, 28
      %v1295 = vpop.permute.xlu0 %1294
      %1296 = vrot.lane.b32.xlu0 %v1207, 28
      %v1297 = vpop.permute.xlu0 %1296
      %1298 = vrot.lane.b32.xlu0 %v1208, 28
      %v1299 = vpop.permute.xlu0 %1298
      %1300 = vrot.lane.b32.xlu0 %v1209, 28
      %v1301 = vpop.permute.xlu0 %1300
      %v1306 = vsel %vm1060, %v1215, %v1231
      %v1307 = vsel %vm1060, %v1217, %v1233
      %v1308 = vsel %vm1060, %v1219, %v1235
      %v1309 = vsel %vm1060, %v1221, %v1237
      %v1310 = vsel %vm473, %v1306, %v1231
      %v1311 = vsel %vm473, %v1307, %v1233
      %v1312 = vsel %vm473, %v1308, %v1235
      %v1313 = vsel %vm473, %v1309, %v1237
      %vm1314 = vcmask 97280
      %v1315 = vsel %vm1314, %v1310, %v1247
      %v1316 = vsel %vm1314, %v1311, %v1249
      %v1317 = vsel %vm1314, %v1312, %v1251
      %v1318 = vsel %vm1314, %v1313, %v1253
      %vm1319 = vcmask 130048
      %v1320 = vsel %vm1319, %v1315, %v1263
      %v1321 = vsel %vm1319, %v1316, %v1265
      %v1322 = vsel %vm1319, %v1317, %v1267
      %v1323 = vsel %vm1319, %v1318, %v1269
      %vm1324 = vcmask 162816
      %v1325 = vsel %vm1324, %v1320, %v1263
      %v1326 = vsel %vm1324, %v1321, %v1265
      %v1327 = vsel %vm1324, %v1322, %v1267
      %v1328 = vsel %vm1324, %v1323, %v1269
      %vm1329 = vcmask 195584
      %v1330 = vsel %vm1329, %v1325, %v1279
      %v1331 = vsel %vm1329, %v1326, %v1281
      %v1332 = vsel %vm1329, %v1327, %v1283
      %v1333 = vsel %vm1329, %v1328, %v1285
      %vm1334 = vcmask 228352
      %v1335 = vsel %vm1334, %v1330, %v1295
      %v1336 = vsel %vm1334, %v1331, %v1297
      %v1337 = vsel %vm1334, %v1332, %v1299
      %v1338 = vsel %vm1334, %v1333, %v1301
      %vm1339 = vcmask 261120
      %v1340 = vsel %vm1339, %v1335, %v1295
      %v1341 = vsel %vm1339, %v1336, %v1297
      %v1342 = vsel %vm1339, %v1337, %v1299
      %v1343 = vsel %vm1339, %v1338, %v1301
      %v1345 = vlaneseq
      %v1346 = vshrl.u32 %v1345, 7
      %v1347 = vsub.s32 0, %v1346
      %v1348 = vrot.slane %v446, %v1347
      %vm1350 = vcmask 293888
      %v1352 = vsel %vm1350, %v1340, 0
      %v1355 = vsel %vm1350, %v1341, 0
      %v1358 = vsel %vm1350, %v1342, 0
      %v1361 = vsel %vm1350, %v1343, 0
      %v1364 = vsel %vm1069, %v443, 0
      %1366 = vmatprep.subr.mxu0 0.0
      %1367 = vmatpush1.msra.mxu0 %v439
      %1368 = vmatprep.subr.mxu0 0.0
      %1369 = vmatpush1.msra.mxu0 %v440
      %1370 = vmatprep.subr.mxu0 0.0
      %1371 = vmatpush1.msra.mxu0 %v441
      %1372 = vmatprep.subr.mxu0 0.0
      %1373 = vmatpush1.msra.mxu0 %v442
      %1374 = vmatprep.subr.mxu0 0.0
      %1375 = vmatpush1.msra.mxu0 %v1364
      %1376 = vmatprep.subr.mxu0 0.0
      %1377 = vmatpush1.msra.mxu0 0.0
      %1378 = vmatprep.subr.mxu0 0.0
      %1379 = vmatpush1.msra.mxu0 0.0
      %1380 = vmatprep.subr.mxu0 0.0
      %1381 = vmatpush1.msra.mxu0 0.0
      %1382 = vmatprep.subr.mxu0 0.0
      %1383 = vmatpush1.msra.mxu0 0.0
      %1384 = vmatprep.subr.mxu0 0.0
      %1385 = vmatpush1.msra.mxu0 0.0
      %1386 = vmatprep.subr.mxu0 0.0
      %1387 = vmatpush1.msra.mxu0 0.0
      %1388 = vmatprep.subr.mxu0 0.0
      %1389 = vmatpush1.msra.mxu0 0.0
      %1390 = vmatprep.subr.mxu0 0.0
      %1391 = vmatpush1.msra.mxu0 0.0
      %1392 = vmatprep.subr.mxu0 0.0
      %1393 = vmatpush1.msra.mxu0 0.0
      %1394 = vmatprep.subr.mxu0 0.0
      %1395 = vmatpush1.msra.mxu0 0.0
      %1396 = vmatprep.subr.mxu0 0.0
      %1397 = vmatpush1.msra.mxu0 0.0
      %1398 = vmatprep.subr.mxu0 0.0
      %1399 = vmatpush1.msra.mxu0 0.0
      %1400 = vmatprep.subr.mxu0 0.0
      %1401 = vmatpush1.msra.mxu0 0.0
      %1402 = vmatprep.subr.mxu0 0.0
      %1403 = vmatpush1.msra.mxu0 0.0
      %1404 = vmatprep.subr.mxu0 0.0
      %1405 = vmatpush1.msra.mxu0 0.0
      %1406 = vmatprep.subr.mxu0 0.0
      %1407 = vmatpush1.msra.mxu0 0.0
      %1408 = vmatprep.subr.mxu0 0.0
      %1409 = vmatpush1.msra.mxu0 0.0
      %1410 = vmatprep.subr.mxu0 0.0
      %1411 = vmatpush1.msra.mxu0 0.0
      %1412 = vmatprep.subr.mxu0 0.0
      %1413 = vmatpush1.msra.mxu0 0.0
      %1414 = vmatprep.subr.mxu0 0.0
      %1415 = vmatpush1.msra.mxu0 0.0
      %1416 = vmatprep.subr.mxu0 0.0
      %1417 = vmatpush1.msra.mxu0 0.0
      %1418 = vmatprep.subr.mxu0 0.0
      %1419 = vmatpush1.msra.mxu0 0.0
      %1420 = vmatprep.subr.mxu0 0.0
      %1421 = vmatpush1.msra.mxu0 0.0
      %1422 = vmatprep.subr.mxu0 0.0
      %1423 = vmatpush1.msra.mxu0 0.0
      %1424 = vmatprep.subr.mxu0 0.0
      %1425 = vmatpush1.msra.mxu0 0.0
      %1426 = vmatprep.subr.mxu0 0.0
      %1427 = vmatpush1.msra.mxu0 0.0
      %1428 = vmatprep.subr.mxu0 0.0
      %1429 = vmatpush1.msra.mxu0 0.0
      %1430 = vmatprep.mubr.f32.mxu0 0.0
      %1431 = vmatmul.mubr.f32.gmra.mrb[0].mxu0 %v1352
      %v1432 = vpop.f32.mrb[0].mxu0
      %v1433 = vadd.f32 %v1348, %v1432
      %v1434 = vpop.f32.mrb[0].mxu0
      %1435 = vmatprep.mubr.f32.mxu0 0.0
      %1436 = vmatmul.mubr.f32.gmra.mrb[0].mxu0 %v1355
      %v1437 = vpop.f32.mrb[0].mxu0
      %v1438 = vadd.f32 %v1348, %v1437
      %v1439 = vpop.f32.mrb[0].mxu0
      %1440 = vmatprep.mubr.f32.mxu0 0.0
      %1441 = vmatmul.mubr.f32.gmra.mrb[0].mxu0 %v1358
      %v1442 = vpop.f32.mrb[0].mxu0
      %v1443 = vadd.f32 %v1348, %v1442
      %v1444 = vpop.f32.mrb[0].mxu0
      %1445 = vmatprep.mubr.f32.mxu0 0.0
      %1446 = vmatmul.mubr.f32.gmra.mrb[0].mxu0 %v1361
      %v1447 = vpop.f32.mrb[0].mxu0
      %v1448 = vadd.f32 %v1348, %v1447
      %v1449 = vpop.f32.mrb[0].mxu0
      %1450 = vdwg.mxu0
      %v1451 = vxor.u32 %v1433, 2147483648
      %v1452 = vxor.u32 %v1438, 2147483648
      %v1453 = vxor.u32 %v1443, 2147483648
      %v1454 = vxor.u32 %v1448, 2147483648
      %v1455 = vmul.f32 %v1451, 1.442695
      %v1456 = vpow.pop %v1455
      %v1457 = vmul.f32 %v1452, 1.442695
      %v1458 = vpow.pop %v1457
      %v1459 = vmul.f32 %v1453, 1.442695
      %v1460 = vpow.pop %v1459
      %v1461 = vmul.f32 %v1454, 1.442695
      %v1462 = vpow.pop %v1461
      %v1463 = vadd.f32 %v1456, 1.0
      %v1464 = vadd.f32 %v1458, 1.0
      %v1465 = vadd.f32 %v1460, 1.0
      %v1466 = vadd.f32 %v1462, 1.0
      %v1467 = vrcp.pop %v1463
      %v1468 = vmul.f32 1.0, %v1467
      %v1469 = vrcp.pop %v1464
      %v1470 = vmul.f32 1.0, %v1469
      %v1471 = vrcp.pop %v1465
      %v1472 = vmul.f32 1.0, %v1471
      %v1473 = vrcp.pop %v1466
      %v1474 = vmul.f32 1.0, %v1473
      %v1475 = vmul.f32 %v1433, %v1468
      %v1476 = vmul.f32 %v1438, %v1470
      %v1477 = vmul.f32 %v1443, %v1472
      %v1478 = vmul.f32 %v1448, %v1474
      %1483 = vrot.lane.b32.xlu0 %v1475, 4
      %v1484 = vpop.permute.xlu0 %1483
      %1485 = vrot.lane.b32.xlu0 %v1476, 4
      %v1486 = vpop.permute.xlu0 %1485
      %1487 = vrot.lane.b32.xlu0 %v1477, 4
      %v1488 = vpop.permute.xlu0 %1487
      %1489 = vrot.lane.b32.xlu0 %v1478, 4
      %v1490 = vpop.permute.xlu0 %1489
      %v1495 = vsel %vm1060, %v1182, %v1484
      %v1496 = vsel %vm1060, %v1183, %v1486
      %v1497 = vsel %vm1060, %v1184, %v1488
      %v1498 = vsel %vm1060, %v1185, %v1490
      %1499 = vst.msk [vmem:[%s435] sm:$0xff] %vm473, %v1495
      %1500 = vst.msk [vmem:[%s435 + $0x8] sm:$0xff] %vm473, %v1496
      %1501 = vst.msk [vmem:[%s435 + $0x10] sm:$0xff] %vm473, %v1497
      %1502 = vst.msk [vmem:[%s435 + $0x18] sm:$0xff] %vm473, %v1498
      %s1503 = smul.u32 4, %s25
      %p1504 = scmp.lt.s32.totalorder %s24, 1
      %s1505 = scalar_select %p1504, %s24, 1
      %p1506 = scmp.lt.s32.totalorder %s1503, 7
      %s1507 = scalar_select %p1506, %s1503, 7
      %s1508 = smul.addr %s1505, 8
      %s1509 = sadd.s32 %s1507, %s1508
      %s1510 = smul.addr %s1509, 8
      %s1511 = scalar_lea.vmem %s9, %s1510
      // Predicated region
      $region65: #{mp_forward.1} parent=55 // pred_check
        %p1512 = pneg %p263
      $region66: #{mp_forward.1} parent=55 // pred_check_branch
        %1514 = sbr.rel (%p1512) target = $region68
      $region67: #{mp_forward.1} parent=55 // pred_region
        %s1515 = smul.u32 4, %s25
      $region68: #{mp_forward.1} parent=55 // pred_fallthru
        _
    $region56: #{mp_forward.1} parent=5 // pred_fallthru
      _
    %p1516 = scmp.le.s32.totalorder 2, %s15
    // Predicated region
    $region69: #{mp_forward.1} parent=5 // pred_check
      %p1517 = pneg %p1516
    $region70: #{mp_forward.1} parent=5 // pred_check_branch
      %1519 = sbr.rel (%p1517) target = $region72
    $region71: #{mp_forward.1} parent=5 // pred_region
      %s1520 = ssub.s32 %s15, 2
      // Predicated region
      $region73: #{mp_forward.1} parent=71 // pred_check
        %p1521 = pneg %p269
      $region74: #{mp_forward.1} parent=71 // pred_check_branch
        %1523 = sbr.rel (%p1521) target = $region76
      $region75: #{mp_forward.1} parent=71 // pred_region
        %s1524 = smul.u32 4, %s27
        %p1525 = scmp.lt.s32.totalorder %s26, 1
        %s1526 = scalar_select %p1525, %s26, 1
        %p1527 = scmp.lt.s32.totalorder %s1524, 7
        %s1528 = scalar_select %p1527, %s1524, 7
        %s1529 = smul.addr %s1526, 8
        %s1530 = sadd.s32 %s1528, %s1529
        %s1531 = smul.addr %s1530, 8
        %s1532 = scalar_lea.vmem %s9, %s1531
      $region76: #{mp_forward.1} parent=71 // pred_fallthru
        _
    $region72: #{mp_forward.1} parent=5 // pred_fallthru
      _
  $region6: #{mp_forward.1} parent=0 // loop_footer
    %s19 = sadd.s32 1, %s15
  $region7: #{mp_forward.1} parent=0 // loop_footer_branch
    %14 = sbr.rel target = $region3
  $region8: #{mp_forward.1} parent=0 // loop_exit
    _

</llo_original>
